<compile_context>
chip_gen: v5e
topology: v5e:2x2
jax: 0.10.0
libtpu: 0.0.40
codegen_flags: <defaults>
</compile_context>

<pallas_src>
import functools

import jax
import jax.numpy as jnp
from jax.experimental import pallas as pl
from jax.experimental.pallas import tpu as pltpu


def _round_up(x, m):
    return (x + m - 1) // m * m


def _topk_router_kernel(x_ref, w_ref, b_ref, router_ref, idx_ref, *, top_k):
    # ---- linear: logits = x @ W^T + b (MXU, f32 accumulate) ----
    logits = jnp.dot(x_ref[...], w_ref[...],
                     preferred_element_type=jnp.float32) + b_ref[...]

    tm, e = logits.shape
    lane_iota = jax.lax.broadcasted_iota(jnp.int32, (tm, e), 1)
    k_iota = jax.lax.broadcasted_iota(jnp.int32, (tm, top_k), 1)
    neg_inf = jnp.float32(-jnp.inf)

    # ---- iterative top-k (top_k is small & static -> unrolled python loop) ----
    work = logits
    row_max = None                                   # set at k == 0 (global row max)
    numer = jnp.zeros((tm, e), jnp.float32)
    denom = jnp.zeros((tm, 1), jnp.float32)
    idx_acc = jnp.zeros((tm, top_k), jnp.int32)

    for k in range(top_k):
        cur_max = jnp.max(work, axis=-1, keepdims=True)            # (tm, 1)
        # lowest index on ties (matches torch.topk ordering for distinct picks)
        cand = jnp.where(work == cur_max, lane_iota, jnp.int32(e))
        cur_idx = jnp.min(cand, axis=-1, keepdims=True)            # (tm, 1) int32
        # accumulate into the K-wide index slab (single store after the loop)
        idx_acc = jnp.where(k_iota == k, cur_idx, idx_acc)
        onehot = lane_iota == cur_idx                               # (tm, e)
        if k == 0:
            row_max = cur_max                                       # reuse for softmax
            exp_k = jnp.ones((tm, 1), jnp.float32)                  # exp(0) == 1, no EUP op
        else:
            exp_k = jnp.exp(cur_max - row_max)                      # (tm, 1)
        denom = denom + exp_k
        numer = numer + jnp.where(onehot, exp_k, jnp.float32(0.0))  # scatter
        work = jnp.where(onehot, neg_inf, work)                     # knock out for next k

    # ---- sparse softmax: numer / denom (unselected lanes are exactly 0) ----
    router_ref[...] = numer * pl.reciprocal(denom, approx=False)
    idx_ref[...] = idx_acc                                          # single (tm, K) store


def topk_router(x, weight, bias, top_k, *, tile_m=512, compute_dtype=jnp.bfloat16):
    """x: (B, T, n_embed); weight: (E, n_embed) [PyTorch layout]; bias: (E,)."""
    B, T, n_embed = x.shape
    E = weight.shape[0]
    M = B * T
    assert 1 <= top_k <= E, "top_k must be in [1, num_experts]"

    # bf16 is the default for the HBM-bound activations/weights (halves the
    # dominant x read); bias + accumulation stay f32.
    x2d = x.reshape(M, n_embed).astype(compute_dtype)
    w = jnp.transpose(weight).astype(compute_dtype)        # (n_embed, E)
    b = bias.reshape(1, E).astype(jnp.float32)

    # Token tile size: big enough to pipeline well (sweep 512/1024/2048),
    # sublane-aligned (mult of 8) or the full token dim.
    tile_m = min(tile_m, M)
    if tile_m != M:
        tile_m = max(8, (tile_m // 8) * 8)
    grid = (pl.cdiv(M, tile_m),)

    kernel = functools.partial(_topk_router_kernel, top_k=top_k)
    itemsize = jnp.dtype(compute_dtype).itemsize

    # ---- explicit VMEM budget: double-buffered lane-padded blocks + headroom ----
    x_bytes = 2 * tile_m * _round_up(n_embed, 128) * itemsize
    w_bytes = 2 * _round_up(n_embed, 8) * _round_up(E, 128) * itemsize
    b_bytes = 2 * 8 * 128 * 4
    r_bytes = 2 * tile_m * _round_up(E, 128) * 4
    i_bytes = 2 * tile_m * _round_up(top_k, 128) * 4
    needed = x_bytes + w_bytes + b_bytes + r_bytes + i_bytes
    vmem_limit = min(64 << 20, max(32 << 20, int(needed * 1.5) + (2 << 20)))

    cost = pl.CostEstimate(
        flops=2 * M * n_embed * E,
        transcendentals=M * max(top_k - 1, 0),
        bytes_accessed=(M * n_embed * itemsize + n_embed * E * itemsize
                        + E * 4 + M * E * 4 + M * top_k * 4),
    )

    router2d, idx2d = pl.pallas_call(
        kernel,
        out_shape=(
            jax.ShapeDtypeStruct((M, E), jnp.float32),
            jax.ShapeDtypeStruct((M, top_k), jnp.int32),
        ),
        grid=grid,
        in_specs=[
            pl.BlockSpec((tile_m, n_embed), lambda i: (i, 0)),   # x: streamed per tile
            pl.BlockSpec((n_embed, E), lambda i: (0, 0)),        # w: VMEM-resident
            pl.BlockSpec((1, E), lambda i: (0, 0)),              # b: VMEM-resident
        ],
        out_specs=(
            pl.BlockSpec((tile_m, E), lambda i: (i, 0)),
            pl.BlockSpec((tile_m, top_k), lambda i: (i, 0)),
        ),
        compiler_params=pltpu.CompilerParams(
            dimension_semantics=("parallel",),                   # megacore on v7x
            vmem_limit_bytes=vmem_limit,
        ),
        cost_estimate=cost,
    )(x2d, w, b)

    return router2d.reshape(B, T, E), idx2d.reshape(B, T, top_k)


if __name__ == "__main__":
    # Small, deterministic example shapes (M = B*T = 256 -> 2 grid steps at tile_m=128).
    B, T, n_embed = 2, 128, 32
    num_experts, top_k = 8, 2

    key = jax.random.PRNGKey(0)
    kx, kw, kb = jax.random.split(key, 3)
    x = jax.random.normal(kx, (B, T, n_embed), dtype=jnp.float32)
    # deterministic "Linear" params (synthetic init, PyTorch weight layout (E, n_embed))
    weight = jax.random.normal(kw, (num_experts, n_embed), dtype=jnp.float32) * 0.1
    bias = jax.random.normal(kb, (num_experts,), dtype=jnp.float32) * 0.1

    router_out, indices = topk_router(x, weight, bias, top_k, tile_m=128)
    jax.block_until_ready((router_out, indices))

    # ---- pure-JAX reference check (same bf16-rounded inputs as the kernel) ----
    xr = x.astype(jnp.bfloat16).astype(jnp.float32)
    wr = weight.astype(jnp.bfloat16).astype(jnp.float32)
    logits = jnp.einsum("btd,ed->bte", xr, wr) + bias
    tk_vals, tk_idx = jax.lax.top_k(logits, top_k)
    onehot = jnp.sum(jax.nn.one_hot(tk_idx, num_experts, dtype=jnp.float32),
                     axis=-2) > 0
    ref_sparse = jnp.where(onehot, logits, -jnp.inf)
    ref_router = jax.nn.softmax(ref_sparse, axis=-1)

    assert router_out.shape == (B, T, num_experts)
    assert indices.shape == (B, T, top_k)
    assert jnp.allclose(router_out, ref_router, atol=2e-3), "router mismatch"
    assert jnp.array_equal(jnp.sort(indices, axis=-1),
                           jnp.sort(tk_idx, axis=-1)), "indices mismatch"

    print("KERNEL_OK")
</pallas_src>

<mosaic_0001>
module attributes {stable_mosaic.version = 11 : i64} {
  func.func @_topk_router_kernel(%arg0: i32, %arg1: memref<128x32xbf16, #tpu.memory_space<vmem>>, %arg2: memref<32x8xbf16, #tpu.memory_space<vmem>>, %arg3: memref<1x8xf32, #tpu.memory_space<vmem>>, %arg4: memref<128x8xf32, #tpu.memory_space<vmem>>, %arg5: memref<128x2xi32, #tpu.memory_space<vmem>>) attributes {dimension_semantics = [#tpu.dimension_semantics<parallel>], iteration_bounds = array<i64: 2>, scalar_prefetch = 0 : i64, scratch_operands = 0 : i64, tpu.core_type = #tpu.core_type<tc>, window_params = [{transform_indices = @transform_0, window_bounds = array<i64: 128, 32>}, {pipeline_mode = #tpu.pipeline_mode<synchronous>, transform_indices = @transform_1, window_bounds = array<i64: 32, 8>}, {pipeline_mode = #tpu.pipeline_mode<synchronous>, transform_indices = @transform_2, window_bounds = array<i64: 1, 8>}, {transform_indices = @transform_3, window_bounds = array<i64: 128, 8>}, {transform_indices = @transform_4, window_bounds = array<i64: 128, 2>}]} {
    %c0 = arith.constant 0 : index
    %c0_0 = arith.constant 0 : index
    %0 = vector.load %arg1[%c0, %c0_0] : memref<128x32xbf16, #tpu.memory_space<vmem>>, vector<128x32xbf16>
    %c0_1 = arith.constant 0 : index
    %c0_2 = arith.constant 0 : index
    %1 = vector.load %arg2[%c0_1, %c0_2] : memref<32x8xbf16, #tpu.memory_space<vmem>>, vector<32x8xbf16>
    %cst = arith.constant dense<0.000000e+00> : vector<128x8xf32>
    %2 = tpu.matmul %0, %1, %cst {dimension_numbers = #tpu.dot_dimension_numbers<[1], [0], [0], [1], [0, 0, 1, 1], [], []>} : vector<128x32xbf16>, vector<32x8xbf16>, vector<128x8xf32> -> vector<128x8xf32>
    %c0_3 = arith.constant 0 : index
    %c0_4 = arith.constant 0 : index
    %3 = vector.load %arg3[%c0_3, %c0_4] : memref<1x8xf32, #tpu.memory_space<vmem>>, vector<1x8xf32>
    %4 = vector.broadcast %3 : vector<1x8xf32> to vector<128x8xf32>
    %5 = arith.addf %2, %4 : vector<128x8xf32>
    %6 = tpu.iota {dimensions = array<i32: 1>} : vector<128x8xi32>
    %7 = tpu.iota {dimensions = array<i32: 1>} : vector<128x2xi32>
    %cst_5 = arith.constant 0.000000e+00 : f32
    %8 = vector.broadcast %cst_5 : f32 to vector<128x8xf32>
    %cst_6 = arith.constant 0.000000e+00 : f32
    %9 = vector.broadcast %cst_6 : f32 to vector<128x1xf32>
    %c0_i32 = arith.constant 0 : i32
    %10 = vector.broadcast %c0_i32 : i32 to vector<128x2xi32>
    %cst_7 = arith.constant dense<0xFF800000> : vector<128xf32>
    %11 = vector.multi_reduction <maximumf>, %5, %cst_7 [1] : vector<128x8xf32> to vector<128xf32>
    %12 = vector.shape_cast %11 : vector<128xf32> to vector<128x1xf32>
    %13 = vector.broadcast %12 : vector<128x1xf32> to vector<128x8xf32>
    %14 = arith.cmpf oeq, %5, %13 : vector<128x8xf32>
    %c8_i32 = arith.constant 8 : i32
    %15 = vector.broadcast %c8_i32 : i32 to vector<128x8xi32>
    %16 = arith.select %14, %6, %15 : vector<128x8xi1>, vector<128x8xi32>
    %cst_8 = arith.constant dense<2147483647> : vector<128xi32>
    %17 = vector.multi_reduction <minsi>, %16, %cst_8 [1] : vector<128x8xi32> to vector<128xi32>
    %18 = vector.shape_cast %17 : vector<128xi32> to vector<128x1xi32>
    %c0_i32_9 = arith.constant 0 : i32
    %19 = vector.broadcast %c0_i32_9 : i32 to vector<128x2xi32>
    %20 = arith.cmpi eq, %7, %19 : vector<128x2xi32>
    %21 = vector.shape_cast %18 : vector<128x1xi32> to vector<128x1xi32>
    %22 = vector.broadcast %21 : vector<128x1xi32> to vector<128x2xi32>
    %23 = arith.select %20, %22, %10 : vector<128x2xi1>, vector<128x2xi32>
    %24 = vector.broadcast %18 : vector<128x1xi32> to vector<128x8xi32>
    %25 = arith.cmpi eq, %6, %24 : vector<128x8xi32>
    %cst_10 = arith.constant 1.000000e+00 : f32
    %26 = vector.broadcast %cst_10 : f32 to vector<128x1xf32>
    %27 = arith.addf %9, %26 : vector<128x1xf32>
    %cst_11 = arith.constant 0.000000e+00 : f32
    %28 = vector.shape_cast %26 : vector<128x1xf32> to vector<128x1xf32>
    %29 = vector.broadcast %28 : vector<128x1xf32> to vector<128x8xf32>
    %30 = vector.broadcast %cst_11 : f32 to vector<128x8xf32>
    %31 = arith.select %25, %29, %30 : vector<128x8xi1>, vector<128x8xf32>
    %32 = arith.addf %8, %31 : vector<128x8xf32>
    %cst_12 = arith.constant 0xFF800000 : f32
    %33 = vector.broadcast %cst_12 : f32 to vector<128x8xf32>
    %34 = arith.select %25, %33, %5 : vector<128x8xi1>, vector<128x8xf32>
    %cst_13 = arith.constant dense<0xFF800000> : vector<128xf32>
    %35 = vector.multi_reduction <maximumf>, %34, %cst_13 [1] : vector<128x8xf32> to vector<128xf32>
    %36 = vector.shape_cast %35 : vector<128xf32> to vector<128x1xf32>
    %37 = vector.broadcast %36 : vector<128x1xf32> to vector<128x8xf32>
    %38 = arith.cmpf oeq, %34, %37 : vector<128x8xf32>
    %c8_i32_14 = arith.constant 8 : i32
    %39 = vector.broadcast %c8_i32_14 : i32 to vector<128x8xi32>
    %40 = arith.select %38, %6, %39 : vector<128x8xi1>, vector<128x8xi32>
    %cst_15 = arith.constant dense<2147483647> : vector<128xi32>
    %41 = vector.multi_reduction <minsi>, %40, %cst_15 [1] : vector<128x8xi32> to vector<128xi32>
    %42 = vector.shape_cast %41 : vector<128xi32> to vector<128x1xi32>
    %c1_i32 = arith.constant 1 : i32
    %43 = vector.broadcast %c1_i32 : i32 to vector<128x2xi32>
    %44 = arith.cmpi eq, %7, %43 : vector<128x2xi32>
    %45 = vector.shape_cast %42 : vector<128x1xi32> to vector<128x1xi32>
    %46 = vector.broadcast %45 : vector<128x1xi32> to vector<128x2xi32>
    %47 = arith.select %44, %46, %23 : vector<128x2xi1>, vector<128x2xi32>
    %48 = vector.broadcast %42 : vector<128x1xi32> to vector<128x8xi32>
    %49 = arith.cmpi eq, %6, %48 : vector<128x8xi32>
    %50 = arith.subf %36, %12 : vector<128x1xf32>
    %51 = math.exp %50 : vector<128x1xf32>
    %52 = arith.addf %27, %51 : vector<128x1xf32>
    %cst_16 = arith.constant 0.000000e+00 : f32
    %53 = vector.shape_cast %51 : vector<128x1xf32> to vector<128x1xf32>
    %54 = vector.broadcast %53 : vector<128x1xf32> to vector<128x8xf32>
    %55 = vector.broadcast %cst_16 : f32 to vector<128x8xf32>
    %56 = arith.select %49, %54, %55 : vector<128x8xi1>, vector<128x8xf32>
    %57 = arith.addf %32, %56 : vector<128x8xf32>
    %58 = tpu.reciprocal %52 : vector<128x1xf32> -> vector<128x1xf32>
    %59 = vector.broadcast %58 : vector<128x1xf32> to vector<128x8xf32>
    %60 = arith.mulf %57, %59 : vector<128x8xf32>
    %c0_17 = arith.constant 0 : index
    %c0_18 = arith.constant 0 : index
    %61 = vector.load %arg4[%c0_17, %c0_18] : memref<128x8xf32, #tpu.memory_space<vmem>>, vector<128x8xf32>
    tpu.vector_store %arg4[%c0_17, %c0_18], %60 {strides = array<i32>} : memref<128x8xf32, #tpu.memory_space<vmem>>, vector<128x8xf32>,
    %c0_19 = arith.constant 0 : index
    %c0_20 = arith.constant 0 : index
    %62 = vector.load %arg5[%c0_19, %c0_20] : memref<128x2xi32, #tpu.memory_space<vmem>>, vector<128x2xi32>
    tpu.vector_store %arg5[%c0_19, %c0_20], %47 {strides = array<i32>} : memref<128x2xi32, #tpu.memory_space<vmem>>, vector<128x2xi32>,
    return
  }
  func.func @transform_0(%arg0: i32) -> (i32, i32) {
    %c0_i32 = arith.constant 0 : i32
    %c0_i32_0 = arith.constant 0 : i32
    return %arg0, %c0_i32 : i32, i32
  }
  func.func @transform_1(%arg0: i32) -> (i32, i32) {
    %c0_i32 = arith.constant 0 : i32
    %c0_i32_0 = arith.constant 0 : i32
    %c0_i32_1 = arith.constant 0 : i32
    return %c0_i32, %c0_i32_0 : i32, i32
  }
  func.func @transform_2(%arg0: i32) -> (i32, i32) {
    %c0_i32 = arith.constant 0 : i32
    %c0_i32_0 = arith.constant 0 : i32
    %c0_i32_1 = arith.constant 0 : i32
    return %c0_i32, %c0_i32_0 : i32, i32
  }
  func.func @transform_3(%arg0: i32) -> (i32, i32) {
    %c0_i32 = arith.constant 0 : i32
    %c0_i32_0 = arith.constant 0 : i32
    return %arg0, %c0_i32 : i32, i32
  }
  func.func @transform_4(%arg0: i32) -> (i32, i32) {
    %c0_i32 = arith.constant 0 : i32
    %c0_i32_0 = arith.constant 0 : i32
    return %arg0, %c0_i32 : i32, i32
  }
}

</mosaic_0001>

<llo_original>
// kernel: tpu_custom_call.1
$region0: #{tpu_custom_call.1}
  #allocation0 [shape = 'u32[]', space=smem, size = 0x4, offset = 0x4, fixed_abs, tag = 'smem constant byte address 0x4 - core index']
  #allocation1 [shape = 'u32[72,128]{1,0:T(1,128)}', space=vmem, size = 0x9000, scoped, tag = 'internal scratch']
  %s0 = inlined_call_operand.vmem [shape: bf16[256,32], index: 0, kind: input, shape index: {}]
  %s1 = inlined_call_operand.vmem [shape: bf16[32,8], index: 1, kind: input, shape index: {}]
  %s2 = inlined_call_operand.vmem [shape: f32[1,8], index: 2, kind: input, shape index: {}]
  %s3 = inlined_call_operand.vmem [shape: f32[256,8], index: 3, kind: output, shape index: {0}]
  %s4 = inlined_call_operand.vmem [shape: s32[256,2], index: 4, kind: output, shape index: {1}]
  %5 = xla_tuple %s3, %s4
  %s6 = sld [smem:[#allocation0]]
  $region53: #{tpu_custom_call.1} parent=0
    _
  %s8 = ssub.s32 1, %s6
  %s9 = scalar_select 0, %s8, %s6
  loop: start=0, step=1, limit=4
  $region2: #{tpu_custom_call.1} parent=0 // loop_pre_header
    _
  $region3: #{tpu_custom_call.1} parent=0 // loop_header
    %s11 = sphi 0, %s15
    %p12 = scmp.ge.s32.totalorder %s11, 4
    %s21 = sphi 0, %s23
    %s24 = sphi 0, %s21
    %s25 = sphi 0, %s24
    %s41 = sphi 0, %s25
    %s45 = sphi 0, %s45
    %s47 = sphi 0, %s45
    %s48 = sphi 0, %s47
    %s62 = sphi 0, %s48
    %s66 = sphi 0, %s66
    %s68 = sphi 0, %s66
    %s69 = sphi 0, %s68
    %s83 = sphi 0, %s69
    %s89 = sphi 0, %s91
    %s92 = sphi 0, %s89
    %s93 = sphi 0, %s92
    %s109 = sphi 0, %s93
    %s115 = sphi 0, %s117
    %s118 = sphi 0, %s115
    %s119 = sphi 0, %s118
    %s135 = sphi 0, %s119
  $region4: #{tpu_custom_call.1} parent=0 // loop_header_branch
    %14 = sbr.rel (%p12) target = $region8
  $region5: #{tpu_custom_call.1} parent=0 // loop_body
    %s16 = ssub.s32 %s11, 1
    %s17 = ssub.s32 %s11, 2
    %s18 = sadd.s32 %s11, 1
    %s19 = ssub.s32 %s11, %s18
    %p20 = scmp.eq.s32.totalorder %s19, 0
    %s22 = sadd.s32 %s21, 1
    %s23 = scalar_select %p20, %s21, %s22
    %p26 = pneg %p20
    %p27 = scmp.eq.s32.totalorder %s11, 1
    %p28 = por %p26, %p27
    %p29 = scmp.ne.s32.totalorder %s21, %s24
    %p30 = scmp.eq.s32.totalorder %s11, 0
    %p31 = por %p29, %p30
    %p32 = scmp.ne.s32.totalorder %s21, %s24
    %p33 = scmp.eq.s32.totalorder %s16, 1
    %p34 = por %p32, %p33
    %p35 = scmp.ne.s32.totalorder %s24, %s25
    %p36 = scmp.eq.s32.totalorder %s16, 0
    %p37 = por %p35, %p36
    %p38 = scmp.ne.s32.totalorder %s24, %s25
    %p39 = scmp.eq.s32.totalorder %s17, 1
    %p40 = por %p38, %p39
    %p42 = scmp.ne.s32.totalorder %s25, %s41
    %p43 = scmp.eq.s32.totalorder %s17, 0
    %p44 = por %p42, %p43
    %s46 = sadd.s32 %s45, 1
    %p49 = scmp.eq.s32.totalorder %s11, 1
    %p50 = scmp.ne.s32.totalorder %s45, %s47
    %p51 = scmp.eq.s32.totalorder %s11, 0
    %p52 = por %p50, %p51
    %p53 = scmp.ne.s32.totalorder %s45, %s47
    %p54 = scmp.eq.s32.totalorder %s16, 1
    %p55 = por %p53, %p54
    %p56 = scmp.ne.s32.totalorder %s47, %s48
    %p57 = scmp.eq.s32.totalorder %s16, 0
    %p58 = por %p56, %p57
    %p59 = scmp.ne.s32.totalorder %s47, %s48
    %p60 = scmp.eq.s32.totalorder %s17, 1
    %p61 = por %p59, %p60
    %p63 = scmp.ne.s32.totalorder %s48, %s62
    %p64 = scmp.eq.s32.totalorder %s17, 0
    %p65 = por %p63, %p64
    %s67 = sadd.s32 %s66, 1
    %p70 = scmp.eq.s32.totalorder %s11, 1
    %p71 = scmp.ne.s32.totalorder %s66, %s68
    %p72 = scmp.eq.s32.totalorder %s11, 0
    %p73 = por %p71, %p72
    %p74 = scmp.ne.s32.totalorder %s66, %s68
    %p75 = scmp.eq.s32.totalorder %s16, 1
    %p76 = por %p74, %p75
    %p77 = scmp.ne.s32.totalorder %s68, %s69
    %p78 = scmp.eq.s32.totalorder %s16, 0
    %p79 = por %p77, %p78
    %p80 = scmp.ne.s32.totalorder %s68, %s69
    %p81 = scmp.eq.s32.totalorder %s17, 1
    %p82 = por %p80, %p81
    %p84 = scmp.ne.s32.totalorder %s69, %s83
    %p85 = scmp.eq.s32.totalorder %s17, 0
    %p86 = por %p84, %p85
    %s87 = ssub.s32 %s11, %s18
    %p88 = scmp.eq.s32.totalorder %s87, 0
    %s90 = sadd.s32 %s89, 1
    %s91 = scalar_select %p88, %s89, %s90
    %p94 = pneg %p88
    %p95 = scmp.eq.s32.totalorder %s11, 1
    %p96 = por %p94, %p95
    %p97 = scmp.ne.s32.totalorder %s89, %s92
    %p98 = scmp.eq.s32.totalorder %s11, 0
    %p99 = por %p97, %p98
    %p100 = scmp.ne.s32.totalorder %s89, %s92
    %p101 = scmp.eq.s32.totalorder %s16, 1
    %p102 = por %p100, %p101
    %p103 = scmp.ne.s32.totalorder %s92, %s93
    %p104 = scmp.eq.s32.totalorder %s16, 0
    %p105 = por %p103, %p104
    %p106 = scmp.ne.s32.totalorder %s92, %s93
    %p107 = scmp.eq.s32.totalorder %s17, 1
    %p108 = por %p106, %p107
    %p110 = scmp.ne.s32.totalorder %s93, %s109
    %p111 = scmp.eq.s32.totalorder %s17, 0
    %p112 = por %p110, %p111
    %s113 = ssub.s32 %s11, %s18
    %p114 = scmp.eq.s32.totalorder %s113, 0
    %s116 = sadd.s32 %s115, 1
    %s117 = scalar_select %p114, %s115, %s116
    %p120 = pneg %p114
    %p121 = scmp.eq.s32.totalorder %s11, 1
    %p122 = por %p120, %p121
    %p123 = scmp.ne.s32.totalorder %s115, %s118
    %p124 = scmp.eq.s32.totalorder %s11, 0
    %p125 = por %p123, %p124
    %p126 = scmp.ne.s32.totalorder %s115, %s118
    %p127 = scmp.eq.s32.totalorder %s16, 1
    %p128 = por %p126, %p127
    %p129 = scmp.ne.s32.totalorder %s118, %s119
    %p130 = scmp.eq.s32.totalorder %s16, 0
    %p131 = por %p129, %p130
    %p132 = scmp.ne.s32.totalorder %s118, %s119
    %p133 = scmp.eq.s32.totalorder %s17, 1
    %p134 = por %p132, %p133
    %p136 = scmp.ne.s32.totalorder %s119, %s135
    %p137 = scmp.eq.s32.totalorder %s17, 0
    %p138 = por %p136, %p137
    %p139 = scmp.le.s32.totalorder 1, %s11
    %p140 = scmp.lt.s32.totalorder %s11, 3
    %p141 = pnand %p139, %p140
    %p142 = pneg %p141
    // Predicated region
    $region9: #{tpu_custom_call.1} parent=5 // pred_check
      _
    $region10: #{tpu_custom_call.1} parent=5 // pred_check_branch
      %144 = sbr.rel (%p141) target = $region12
    $region11: #{tpu_custom_call.1} parent=5 // pred_region
      %s145 = ssub.s32 %s11, 1
      // Predicated region
      $region13: #{tpu_custom_call.1} parent=11 // pred_check
        %p146 = pneg %p58
      $region14: #{tpu_custom_call.1} parent=11 // pred_check_branch
        %148 = sbr.rel (%p146) target = $region16
      $region15: #{tpu_custom_call.1} parent=11 // pred_region
        _
      $region16: #{tpu_custom_call.1} parent=11 // pred_fallthru
        _
      // Predicated region
      $region17: #{tpu_custom_call.1} parent=11 // pred_check
        %p149 = pneg %p79
      $region18: #{tpu_custom_call.1} parent=11 // pred_check_branch
        %151 = sbr.rel (%p149) target = $region20
      $region19: #{tpu_custom_call.1} parent=11 // pred_region
        _
      $region20: #{tpu_custom_call.1} parent=11 // pred_fallthru
        _
    $region12: #{tpu_custom_call.1} parent=5 // pred_fallthru
      _
    %p152 = scmp.lt.s32.totalorder %s11, 2
    // Predicated region
    $region21: #{tpu_custom_call.1} parent=5 // pred_check
      %p153 = pneg %p152
    $region22: #{tpu_custom_call.1} parent=5 // pred_check_branch
      %155 = sbr.rel (%p153) target = $region24
    $region23: #{tpu_custom_call.1} parent=5 // pred_region
      // Predicated region
      $region25: #{tpu_custom_call.1} parent=23 // pred_check
        %p156 = pneg %p31
      $region26: #{tpu_custom_call.1} parent=23 // pred_check_branch
        %158 = sbr.rel (%p156) target = $region28
      $region27: #{tpu_custom_call.1} parent=23 // pred_region
        %s159 = smul.u32 16, %s11
        %p160 = scmp.lt.s32.totalorder %s159, 31
        %s161 = scalar_select %p160, %s159, 31
        %s162 = smul.addr %s161, 4
        %s163 = scalar_lea.vmem %s0, %s162
        %s164 = smul.u32 16, %s11
      $region28: #{tpu_custom_call.1} parent=23 // pred_fallthru
        _
    $region24: #{tpu_custom_call.1} parent=5 // pred_fallthru
      _
    %p165 = scmp.le.s32.totalorder 1, %s11
    %p166 = scmp.lt.s32.totalorder %s11, 3
    %p167 = pnand %p165, %p166
    %p168 = pneg %p167
    // Predicated region
    $region29: #{tpu_custom_call.1} parent=5 // pred_check
      _
    $region30: #{tpu_custom_call.1} parent=5 // pred_check_branch
      %170 = sbr.rel (%p167) target = $region32
    $region31: #{tpu_custom_call.1} parent=5 // pred_region
      %s171 = ssub.s32 %s11, 1
      %s172 = smul.u32 16, %s16
      %p173 = scmp.lt.s32.totalorder %s172, 31
      %s174 = scalar_select %p173, %s172, 31
      %s175 = smul.addr %s174, 4
      %s176 = scalar_lea.vmem %s0, %s175
      %p177 = pneg %p37
      %p178 = pneg %p34
      %p179 = pneg %p58
      %p180 = pneg %p55
      %p181 = pneg %p79
      %p182 = pneg %p76
      %p183 = pneg %p105
      %p184 = pneg %p102
      %s185 = smul.u32 16, %s16
      %p186 = scmp.lt.s32.totalorder %s185, 31
      %s187 = scalar_select %p186, %s185, 31
      %s188 = smul.addr %s187, 8
      %s189 = scalar_lea.vmem %s3, %s188
      %p190 = pneg %p131
      %p191 = pneg %p128
      %s192 = smul.u32 16, %s16
      %p193 = scmp.lt.s32.totalorder %s192, 31
      %s194 = scalar_select %p193, %s192, 31
      %s195 = smul.addr %s194, 8
      %s196 = scalar_lea.vmem %s4, %s195
      %s197 = smul.u32 16, %s16
      %p198 = scmp.lt.s32.totalorder %s197, 31
      %s199 = scalar_select %p198, %s197, 31
      %s200 = smul.addr %s199, 4
      %s201 = scalar_lea.vmem %s0, %s200
      %s202 = smul.u32 16, %s16
      %s203 = smul.u32 16, %s16
      %p204 = scmp.lt.s32.totalorder %s203, 31
      %s205 = scalar_select %p204, %s203, 31
      %s206 = smul.addr %s205, 8
      %s207 = scalar_lea.vmem %s3, %s206
      %s208 = smul.u32 16, %s16
      %s209 = smul.u32 16, %s16
      %p210 = scmp.lt.s32.totalorder %s209, 31
      %s211 = scalar_select %p210, %s209, 31
      %s212 = smul.addr %s211, 8
      %s213 = scalar_lea.vmem %s4, %s212
      %s214 = smul.u32 16, %s16
      %v216 = vld [vmem:[%s201] sm:$0xf]
      %v217 = vld [vmem:[%s201 + $0x4] sm:$0xf]
      %v218 = vld [vmem:[%s201 + $0x8] sm:$0xf]
      %v219 = vld [vmem:[%s201 + $0xc] sm:$0xf]
      %v220 = vld [vmem:[%s201 + $0x10] sm:$0xf]
      %v221 = vld [vmem:[%s201 + $0x14] sm:$0xf]
      %v222 = vld [vmem:[%s201 + $0x18] sm:$0xf]
      %v223 = vld [vmem:[%s201 + $0x1c] sm:$0xf]
      %v224 = vld [vmem:[%s201 + $0x20] sm:$0xf]
      %v225 = vld [vmem:[%s201 + $0x24] sm:$0xf]
      %v226 = vld [vmem:[%s201 + $0x28] sm:$0xf]
      %v227 = vld [vmem:[%s201 + $0x2c] sm:$0xf]
      %v228 = vld [vmem:[%s201 + $0x30] sm:$0xf]
      %v229 = vld [vmem:[%s201 + $0x34] sm:$0xf]
      %v230 = vld [vmem:[%s201 + $0x38] sm:$0xf]
      %v231 = vld [vmem:[%s201 + $0x3c] sm:$0xf]
      %v232 = vld [vmem:[%s1] sm:$0xf]
      %v233 = vld [vmem:[%s1 + $0x4] sm:$0xf]
      %v234 = vld [vmem:[%s1 + $0x8] sm:$0xf]
      %v235 = vld [vmem:[%s1 + $0xc] sm:$0xf]
      %v236 = vld [vmem:[%s2] sm:$0x1]
      %v238 = vperm.slane %v236, 0
      %v256 = vunpack.c.l.b16 %v216
      %v257 = vunpack.c.l.b16 %v217
      %v258 = vunpack.c.l.b16 %v218
      %v259 = vunpack.c.l.b16 %v219
      %v260 = vunpack.c.l.b16 %v220
      %v261 = vunpack.c.l.b16 %v221
      %v262 = vunpack.c.l.b16 %v222
      %v263 = vunpack.c.l.b16 %v223
      %v264 = vunpack.c.l.b16 %v224
      %v265 = vunpack.c.l.b16 %v225
      %v266 = vunpack.c.l.b16 %v226
      %v267 = vunpack.c.l.b16 %v227
      %v268 = vunpack.c.l.b16 %v228
      %v269 = vunpack.c.l.b16 %v229
      %v270 = vunpack.c.l.b16 %v230
      %v271 = vunpack.c.l.b16 %v231
      %v272 = vpack.c.b16 %v257, %v256
      %v273 = vpack.c.b16 %v259, %v258
      %v274 = vpack.c.b16 %v261, %v260
      %v275 = vpack.c.b16 %v263, %v262
      %v276 = vpack.c.b16 %v265, %v264
      %v277 = vpack.c.b16 %v267, %v266
      %v278 = vpack.c.b16 %v269, %v268
      %v279 = vpack.c.b16 %v271, %v270
      %v284 = vunpack.c.l.b16 %v232
      %v285 = vunpack.c.l.b16 %v233
      %v286 = vunpack.c.l.b16 %v234
      %v287 = vunpack.c.l.b16 %v235
      %v288 = vpack.c.b16 %v285, %v284
      %v289 = vpack.c.b16 %v287, %v286
      %vm292 = vcmask 261120
      %v294 = vsel %vm292, %v272, 0
      %v297 = vsel %vm292, %v273, 0
      %v300 = vsel %vm292, %v274, 0
      %v303 = vsel %vm292, %v275, 0
      %v306 = vsel %vm292, %v276, 0
      %v309 = vsel %vm292, %v277, 0
      %v312 = vsel %vm292, %v278, 0
      %v315 = vsel %vm292, %v279, 0
      %317 = vmatpush.bf16.msra.mxu0 0
      %318 = vmatpush.bf16.msra.mxu0 0
      %319 = vmatpush.bf16.msra.mxu0 0
      %320 = vmatpush.bf16.msra.mxu0 0
      %321 = vmatpush.bf16.msra.mxu0 0
      %322 = vmatpush.bf16.msra.mxu0 0
      %323 = vmatpush.bf16.msra.mxu0 %v289
      %324 = vmatpush.bf16.msra.mxu0 %v288
      %325 = vmatmul.bf16.gmra.mxu0 %v294
      %v326 = vpop.f32.mrf.mxu0
      %v327 = vadd.f32 %v238, %v326
      %v328 = vpop.f32.mrf.mxu0
      %v329 = vadd.f32 %v238, %v328
      %330 = vmatmul.bf16.gmra.mxu0 %v297
      %v331 = vpop.f32.mrf.mxu0
      %v332 = vadd.f32 %v238, %v331
      %v333 = vpop.f32.mrf.mxu0
      %v334 = vadd.f32 %v238, %v333
      %335 = vmatmul.bf16.gmra.mxu0 %v300
      %v336 = vpop.f32.mrf.mxu0
      %v337 = vadd.f32 %v238, %v336
      %v338 = vpop.f32.mrf.mxu0
      %v339 = vadd.f32 %v238, %v338
      %340 = vmatmul.bf16.gmra.mxu0 %v303
      %v341 = vpop.f32.mrf.mxu0
      %v342 = vadd.f32 %v238, %v341
      %v343 = vpop.f32.mrf.mxu0
      %v344 = vadd.f32 %v238, %v343
      %345 = vmatmul.bf16.gmra.mxu0 %v306
      %v346 = vpop.f32.mrf.mxu0
      %v347 = vadd.f32 %v238, %v346
      %v348 = vpop.f32.mrf.mxu0
      %v349 = vadd.f32 %v238, %v348
      %350 = vmatmul.bf16.gmra.mxu0 %v309
      %v351 = vpop.f32.mrf.mxu0
      %v352 = vadd.f32 %v238, %v351
      %v353 = vpop.f32.mrf.mxu0
      %v354 = vadd.f32 %v238, %v353
      %355 = vmatmul.bf16.gmra.mxu0 %v312
      %v356 = vpop.f32.mrf.mxu0
      %v357 = vadd.f32 %v238, %v356
      %v358 = vpop.f32.mrf.mxu0
      %v359 = vadd.f32 %v238, %v358
      %360 = vmatmul.bf16.gmra.mxu0 %v315
      %v361 = vpop.f32.mrf.mxu0
      %v362 = vadd.f32 %v238, %v361
      %v363 = vpop.f32.mrf.mxu0
      %v364 = vadd.f32 %v238, %v363
      %365 = vdwg.mxu0
      %v366 = vlaneseq
      %v367 = vand.u32 %v366, 127
      %vm368 = vcmask 64512
      %v369 = vsel %vm368, %v327, -inf
      %370 = vmax.xlane.f32.xlu0 %v369
      %v371 = vpop.xlane.xlu0 %370
      %v372 = vsel %vm368, %v329, -inf
      %373 = vmax.xlane.f32.xlu0 %v372
      %v374 = vpop.xlane.xlu0 %373
      %v375 = vsel %vm368, %v332, -inf
      %376 = vmax.xlane.f32.xlu0 %v375
      %v377 = vpop.xlane.xlu0 %376
      %v378 = vsel %vm368, %v334, -inf
      %379 = vmax.xlane.f32.xlu0 %v378
      %v380 = vpop.xlane.xlu0 %379
      %v381 = vsel %vm368, %v337, -inf
      %382 = vmax.xlane.f32.xlu0 %v381
      %v383 = vpop.xlane.xlu0 %382
      %v384 = vsel %vm368, %v339, -inf
      %385 = vmax.xlane.f32.xlu0 %v384
      %v386 = vpop.xlane.xlu0 %385
      %v387 = vsel %vm368, %v342, -inf
      %388 = vmax.xlane.f32.xlu0 %v387
      %v389 = vpop.xlane.xlu0 %388
      %v390 = vsel %vm368, %v344, -inf
      %391 = vmax.xlane.f32.xlu0 %v390
      %v392 = vpop.xlane.xlu0 %391
      %v393 = vsel %vm368, %v347, -inf
      %394 = vmax.xlane.f32.xlu0 %v393
      %v395 = vpop.xlane.xlu0 %394
      %v396 = vsel %vm368, %v349, -inf
      %397 = vmax.xlane.f32.xlu0 %v396
      %v398 = vpop.xlane.xlu0 %397
      %v399 = vsel %vm368, %v352, -inf
      %400 = vmax.xlane.f32.xlu0 %v399
      %v401 = vpop.xlane.xlu0 %400
      %v402 = vsel %vm368, %v354, -inf
      %403 = vmax.xlane.f32.xlu0 %v402
      %v404 = vpop.xlane.xlu0 %403
      %v405 = vsel %vm368, %v357, -inf
      %406 = vmax.xlane.f32.xlu0 %v405
      %v407 = vpop.xlane.xlu0 %406
      %v408 = vsel %vm368, %v359, -inf
      %409 = vmax.xlane.f32.xlu0 %v408
      %v410 = vpop.xlane.xlu0 %409
      %v411 = vsel %vm368, %v362, -inf
      %412 = vmax.xlane.f32.xlu0 %v411
      %v413 = vpop.xlane.xlu0 %412
      %v414 = vsel %vm368, %v364, -inf
      %415 = vmax.xlane.f32.xlu0 %v414
      %v416 = vpop.xlane.xlu0 %415
      %vm417 = vcmp.eq.f32.partialorder %v327, %v371
      %vm418 = vcmp.eq.f32.partialorder %v329, %v374
      %vm419 = vcmp.eq.f32.partialorder %v332, %v377
      %vm420 = vcmp.eq.f32.partialorder %v334, %v380
      %vm421 = vcmp.eq.f32.partialorder %v337, %v383
      %vm422 = vcmp.eq.f32.partialorder %v339, %v386
      %vm423 = vcmp.eq.f32.partialorder %v342, %v389
      %vm424 = vcmp.eq.f32.partialorder %v344, %v392
      %vm425 = vcmp.eq.f32.partialorder %v347, %v395
      %vm426 = vcmp.eq.f32.partialorder %v349, %v398
      %vm427 = vcmp.eq.f32.partialorder %v352, %v401
      %vm428 = vcmp.eq.f32.partialorder %v354, %v404
      %vm429 = vcmp.eq.f32.partialorder %v357, %v407
      %vm430 = vcmp.eq.f32.partialorder %v359, %v410
      %vm431 = vcmp.eq.f32.partialorder %v362, %v413
      %vm432 = vcmp.eq.f32.partialorder %v364, %v416
      %v433 = vsel %vm417, %v367, 8
      %v434 = vsel %vm418, %v367, 8
      %v435 = vsel %vm419, %v367, 8
      %v436 = vsel %vm420, %v367, 8
      %v437 = vsel %vm421, %v367, 8
      %v438 = vsel %vm422, %v367, 8
      %v439 = vsel %vm423, %v367, 8
      %v440 = vsel %vm424, %v367, 8
      %v441 = vsel %vm425, %v367, 8
      %v442 = vsel %vm426, %v367, 8
      %v443 = vsel %vm427, %v367, 8
      %v444 = vsel %vm428, %v367, 8
      %v445 = vsel %vm429, %v367, 8
      %v446 = vsel %vm430, %v367, 8
      %v447 = vsel %vm431, %v367, 8
      %v448 = vsel %vm432, %v367, 8
      %v449 = vsel %vm368, %v433, 2147483647
      %v450 = vand.u32 %v449, 65535
      %v451 = vshra.s32 %v449, 16
      %v452 = vcvt.s32.f32 %v450
      %v453 = vcvt.s32.f32 %v451
      %454 = vmin.xlane.f32.xlu0 %v453
      %v455 = vpop.xlane.xlu0 %454
      %vm456 = vcmp.eq.f32.partialorder %v453, %v455
      %v457 = vsel %vm456, %v452, inf
      %458 = vmin.xlane.f32.xlu0 %v457
      %v459 = vpop.xlane.xlu0 %458
      %v460 = vcvt.f32.s32 %v459
      %v461 = vcvt.f32.s32 %v455
      %v462 = vshll.u32 %v461, 16
      %v463 = vadd.s32 %v462, %v460
      %v464 = vsel %vm368, %v434, 2147483647
      %v465 = vand.u32 %v464, 65535
      %v466 = vshra.s32 %v464, 16
      %v467 = vcvt.s32.f32 %v465
      %v468 = vcvt.s32.f32 %v466
      %469 = vmin.xlane.f32.xlu0 %v468
      %v470 = vpop.xlane.xlu0 %469
      %vm471 = vcmp.eq.f32.partialorder %v468, %v470
      %v472 = vsel %vm471, %v467, inf
      %473 = vmin.xlane.f32.xlu0 %v472
      %v474 = vpop.xlane.xlu0 %473
      %v475 = vcvt.f32.s32 %v474
      %v476 = vcvt.f32.s32 %v470
      %v477 = vshll.u32 %v476, 16
      %v478 = vadd.s32 %v477, %v475
      %v479 = vsel %vm368, %v435, 2147483647
      %v480 = vand.u32 %v479, 65535
      %v481 = vshra.s32 %v479, 16
      %v482 = vcvt.s32.f32 %v480
      %v483 = vcvt.s32.f32 %v481
      %484 = vmin.xlane.f32.xlu0 %v483
      %v485 = vpop.xlane.xlu0 %484
      %vm486 = vcmp.eq.f32.partialorder %v483, %v485
      %v487 = vsel %vm486, %v482, inf
      %488 = vmin.xlane.f32.xlu0 %v487
      %v489 = vpop.xlane.xlu0 %488
      %v490 = vcvt.f32.s32 %v489
      %v491 = vcvt.f32.s32 %v485
      %v492 = vshll.u32 %v491, 16
      %v493 = vadd.s32 %v492, %v490
      %v494 = vsel %vm368, %v436, 2147483647
      %v495 = vand.u32 %v494, 65535
      %v496 = vshra.s32 %v494, 16
      %v497 = vcvt.s32.f32 %v495
      %v498 = vcvt.s32.f32 %v496
      %499 = vmin.xlane.f32.xlu0 %v498
      %v500 = vpop.xlane.xlu0 %499
      %vm501 = vcmp.eq.f32.partialorder %v498, %v500
      %v502 = vsel %vm501, %v497, inf
      %503 = vmin.xlane.f32.xlu0 %v502
      %v504 = vpop.xlane.xlu0 %503
      %v505 = vcvt.f32.s32 %v504
      %v506 = vcvt.f32.s32 %v500
      %v507 = vshll.u32 %v506, 16
      %v508 = vadd.s32 %v507, %v505
      %v509 = vsel %vm368, %v437, 2147483647
      %v510 = vand.u32 %v509, 65535
      %v511 = vshra.s32 %v509, 16
      %v512 = vcvt.s32.f32 %v510
      %v513 = vcvt.s32.f32 %v511
      %514 = vmin.xlane.f32.xlu0 %v513
      %v515 = vpop.xlane.xlu0 %514
      %vm516 = vcmp.eq.f32.partialorder %v513, %v515
      %v517 = vsel %vm516, %v512, inf
      %518 = vmin.xlane.f32.xlu0 %v517
      %v519 = vpop.xlane.xlu0 %518
      %v520 = vcvt.f32.s32 %v519
      %v521 = vcvt.f32.s32 %v515
      %v522 = vshll.u32 %v521, 16
      %v523 = vadd.s32 %v522, %v520
      %v524 = vsel %vm368, %v438, 2147483647
      %v525 = vand.u32 %v524, 65535
      %v526 = vshra.s32 %v524, 16
      %v527 = vcvt.s32.f32 %v525
      %v528 = vcvt.s32.f32 %v526
      %529 = vmin.xlane.f32.xlu0 %v528
      %v530 = vpop.xlane.xlu0 %529
      %vm531 = vcmp.eq.f32.partialorder %v528, %v530
      %v532 = vsel %vm531, %v527, inf
      %533 = vmin.xlane.f32.xlu0 %v532
      %v534 = vpop.xlane.xlu0 %533
      %v535 = vcvt.f32.s32 %v534
      %v536 = vcvt.f32.s32 %v530
      %v537 = vshll.u32 %v536, 16
      %v538 = vadd.s32 %v537, %v535
      %v539 = vsel %vm368, %v439, 2147483647
      %v540 = vand.u32 %v539, 65535
      %v541 = vshra.s32 %v539, 16
      %v542 = vcvt.s32.f32 %v540
      %v543 = vcvt.s32.f32 %v541
      %544 = vmin.xlane.f32.xlu0 %v543
      %v545 = vpop.xlane.xlu0 %544
      %vm546 = vcmp.eq.f32.partialorder %v543, %v545
      %v547 = vsel %vm546, %v542, inf
      %548 = vmin.xlane.f32.xlu0 %v547
      %v549 = vpop.xlane.xlu0 %548
      %v550 = vcvt.f32.s32 %v549
      %v551 = vcvt.f32.s32 %v545
      %v552 = vshll.u32 %v551, 16
      %v553 = vadd.s32 %v552, %v550
      %v554 = vsel %vm368, %v440, 2147483647
      %v555 = vand.u32 %v554, 65535
      %v556 = vshra.s32 %v554, 16
      %v557 = vcvt.s32.f32 %v555
      %v558 = vcvt.s32.f32 %v556
      %559 = vmin.xlane.f32.xlu0 %v558
      %v560 = vpop.xlane.xlu0 %559
      %vm561 = vcmp.eq.f32.partialorder %v558, %v560
      %v562 = vsel %vm561, %v557, inf
      %563 = vmin.xlane.f32.xlu0 %v562
      %v564 = vpop.xlane.xlu0 %563
      %v565 = vcvt.f32.s32 %v564
      %v566 = vcvt.f32.s32 %v560
      %v567 = vshll.u32 %v566, 16
      %v568 = vadd.s32 %v567, %v565
      %v569 = vsel %vm368, %v441, 2147483647
      %v570 = vand.u32 %v569, 65535
      %v571 = vshra.s32 %v569, 16
      %v572 = vcvt.s32.f32 %v570
      %v573 = vcvt.s32.f32 %v571
      %574 = vmin.xlane.f32.xlu0 %v573
      %v575 = vpop.xlane.xlu0 %574
      %vm576 = vcmp.eq.f32.partialorder %v573, %v575
      %v577 = vsel %vm576, %v572, inf
      %578 = vmin.xlane.f32.xlu0 %v577
      %v579 = vpop.xlane.xlu0 %578
      %v580 = vcvt.f32.s32 %v579
      %v581 = vcvt.f32.s32 %v575
      %v582 = vshll.u32 %v581, 16
      %v583 = vadd.s32 %v582, %v580
      %v584 = vsel %vm368, %v442, 2147483647
      %v585 = vand.u32 %v584, 65535
      %v586 = vshra.s32 %v584, 16
      %v587 = vcvt.s32.f32 %v585
      %v588 = vcvt.s32.f32 %v586
      %589 = vmin.xlane.f32.xlu0 %v588
      %v590 = vpop.xlane.xlu0 %589
      %vm591 = vcmp.eq.f32.partialorder %v588, %v590
      %v592 = vsel %vm591, %v587, inf
      %593 = vmin.xlane.f32.xlu0 %v592
      %v594 = vpop.xlane.xlu0 %593
      %v595 = vcvt.f32.s32 %v594
      %v596 = vcvt.f32.s32 %v590
      %v597 = vshll.u32 %v596, 16
      %v598 = vadd.s32 %v597, %v595
      %v599 = vsel %vm368, %v443, 2147483647
      %v600 = vand.u32 %v599, 65535
      %v601 = vshra.s32 %v599, 16
      %v602 = vcvt.s32.f32 %v600
      %v603 = vcvt.s32.f32 %v601
      %604 = vmin.xlane.f32.xlu0 %v603
      %v605 = vpop.xlane.xlu0 %604
      %vm606 = vcmp.eq.f32.partialorder %v603, %v605
      %v607 = vsel %vm606, %v602, inf
      %608 = vmin.xlane.f32.xlu0 %v607
      %v609 = vpop.xlane.xlu0 %608
      %v610 = vcvt.f32.s32 %v609
      %v611 = vcvt.f32.s32 %v605
      %v612 = vshll.u32 %v611, 16
      %v613 = vadd.s32 %v612, %v610
      %v614 = vsel %vm368, %v444, 2147483647
      %v615 = vand.u32 %v614, 65535
      %v616 = vshra.s32 %v614, 16
      %v617 = vcvt.s32.f32 %v615
      %v618 = vcvt.s32.f32 %v616
      %619 = vmin.xlane.f32.xlu0 %v618
      %v620 = vpop.xlane.xlu0 %619
      %vm621 = vcmp.eq.f32.partialorder %v618, %v620
      %v622 = vsel %vm621, %v617, inf
      %623 = vmin.xlane.f32.xlu0 %v622
      %v624 = vpop.xlane.xlu0 %623
      %v625 = vcvt.f32.s32 %v624
      %v626 = vcvt.f32.s32 %v620
      %v627 = vshll.u32 %v626, 16
      %v628 = vadd.s32 %v627, %v625
      %v629 = vsel %vm368, %v445, 2147483647
      %v630 = vand.u32 %v629, 65535
      %v631 = vshra.s32 %v629, 16
      %v632 = vcvt.s32.f32 %v630
      %v633 = vcvt.s32.f32 %v631
      %634 = vmin.xlane.f32.xlu0 %v633
      %v635 = vpop.xlane.xlu0 %634
      %vm636 = vcmp.eq.f32.partialorder %v633, %v635
      %v637 = vsel %vm636, %v632, inf
      %638 = vmin.xlane.f32.xlu0 %v637
      %v639 = vpop.xlane.xlu0 %638
      %v640 = vcvt.f32.s32 %v639
      %v641 = vcvt.f32.s32 %v635
      %v642 = vshll.u32 %v641, 16
      %v643 = vadd.s32 %v642, %v640
      %v644 = vsel %vm368, %v446, 2147483647
      %v645 = vand.u32 %v644, 65535
      %v646 = vshra.s32 %v644, 16
      %v647 = vcvt.s32.f32 %v645
      %v648 = vcvt.s32.f32 %v646
      %649 = vmin.xlane.f32.xlu0 %v648
      %v650 = vpop.xlane.xlu0 %649
      %vm651 = vcmp.eq.f32.partialorder %v648, %v650
      %v652 = vsel %vm651, %v647, inf
      %653 = vmin.xlane.f32.xlu0 %v652
      %v654 = vpop.xlane.xlu0 %653
      %v655 = vcvt.f32.s32 %v654
      %v656 = vcvt.f32.s32 %v650
      %v657 = vshll.u32 %v656, 16
      %v658 = vadd.s32 %v657, %v655
      %v659 = vsel %vm368, %v447, 2147483647
      %v660 = vand.u32 %v659, 65535
      %v661 = vshra.s32 %v659, 16
      %v662 = vcvt.s32.f32 %v660
      %v663 = vcvt.s32.f32 %v661
      %664 = vmin.xlane.f32.xlu0 %v663
      %v665 = vpop.xlane.xlu0 %664
      %vm666 = vcmp.eq.f32.partialorder %v663, %v665
      %v667 = vsel %vm666, %v662, inf
      %668 = vmin.xlane.f32.xlu0 %v667
      %v669 = vpop.xlane.xlu0 %668
      %v670 = vcvt.f32.s32 %v669
      %v671 = vcvt.f32.s32 %v665
      %v672 = vshll.u32 %v671, 16
      %v673 = vadd.s32 %v672, %v670
      %v674 = vsel %vm368, %v448, 2147483647
      %v675 = vand.u32 %v674, 65535
      %v676 = vshra.s32 %v674, 16
      %v677 = vcvt.s32.f32 %v675
      %v678 = vcvt.s32.f32 %v676
      %679 = vmin.xlane.f32.xlu0 %v678
      %v680 = vpop.xlane.xlu0 %679
      %vm681 = vcmp.eq.f32.partialorder %v678, %v680
      %v682 = vsel %vm681, %v677, inf
      %683 = vmin.xlane.f32.xlu0 %v682
      %v684 = vpop.xlane.xlu0 %683
      %v685 = vcvt.f32.s32 %v684
      %v686 = vcvt.f32.s32 %v680
      %v687 = vshll.u32 %v686, 16
      %v688 = vadd.s32 %v687, %v685
      %vm689 = vcmp.eq.s32.totalorder %v367, 0
      %v690 = vsel %vm689, %v463, 0
      %v691 = vsel %vm689, %v478, 0
      %v692 = vsel %vm689, %v493, 0
      %v693 = vsel %vm689, %v508, 0
      %v694 = vsel %vm689, %v523, 0
      %v695 = vsel %vm689, %v538, 0
      %v696 = vsel %vm689, %v553, 0
      %v697 = vsel %vm689, %v568, 0
      %v698 = vsel %vm689, %v583, 0
      %v699 = vsel %vm689, %v598, 0
      %v700 = vsel %vm689, %v613, 0
      %v701 = vsel %vm689, %v628, 0
      %v702 = vsel %vm689, %v643, 0
      %v703 = vsel %vm689, %v658, 0
      %v704 = vsel %vm689, %v673, 0
      %v705 = vsel %vm689, %v688, 0
      %vm706 = vcmp.eq.s32.totalorder %v367, %v463
      %vm707 = vcmp.eq.s32.totalorder %v367, %v478
      %vm708 = vcmp.eq.s32.totalorder %v367, %v493
      %vm709 = vcmp.eq.s32.totalorder %v367, %v508
      %vm710 = vcmp.eq.s32.totalorder %v367, %v523
      %vm711 = vcmp.eq.s32.totalorder %v367, %v538
      %vm712 = vcmp.eq.s32.totalorder %v367, %v553
      %vm713 = vcmp.eq.s32.totalorder %v367, %v568
      %vm714 = vcmp.eq.s32.totalorder %v367, %v583
      %vm715 = vcmp.eq.s32.totalorder %v367, %v598
      %vm716 = vcmp.eq.s32.totalorder %v367, %v613
      %vm717 = vcmp.eq.s32.totalorder %v367, %v628
      %vm718 = vcmp.eq.s32.totalorder %v367, %v643
      %vm719 = vcmp.eq.s32.totalorder %v367, %v658
      %vm720 = vcmp.eq.s32.totalorder %v367, %v673
      %vm721 = vcmp.eq.s32.totalorder %v367, %v688
      %v722 = vsel %vm706, 1.0, 0.0
      %v723 = vsel %vm707, 1.0, 0.0
      %v724 = vsel %vm708, 1.0, 0.0
      %v725 = vsel %vm709, 1.0, 0.0
      %v726 = vsel %vm710, 1.0, 0.0
      %v727 = vsel %vm711, 1.0, 0.0
      %v728 = vsel %vm712, 1.0, 0.0
      %v729 = vsel %vm713, 1.0, 0.0
      %v730 = vsel %vm714, 1.0, 0.0
      %v731 = vsel %vm715, 1.0, 0.0
      %v732 = vsel %vm716, 1.0, 0.0
      %v733 = vsel %vm717, 1.0, 0.0
      %v734 = vsel %vm718, 1.0, 0.0
      %v735 = vsel %vm719, 1.0, 0.0
      %v736 = vsel %vm720, 1.0, 0.0
      %v737 = vsel %vm721, 1.0, 0.0
      %v738 = vadd.f32 %v722, 0.0
      %v739 = vadd.f32 %v723, 0.0
      %v740 = vadd.f32 %v724, 0.0
      %v741 = vadd.f32 %v725, 0.0
      %v742 = vadd.f32 %v726, 0.0
      %v743 = vadd.f32 %v727, 0.0
      %v744 = vadd.f32 %v728, 0.0
      %v745 = vadd.f32 %v729, 0.0
      %v746 = vadd.f32 %v730, 0.0
      %v747 = vadd.f32 %v731, 0.0
      %v748 = vadd.f32 %v732, 0.0
      %v749 = vadd.f32 %v733, 0.0
      %v750 = vadd.f32 %v734, 0.0
      %v751 = vadd.f32 %v735, 0.0
      %v752 = vadd.f32 %v736, 0.0
      %v753 = vadd.f32 %v737, 0.0
      %v754 = vsel %vm706, -inf, %v327
      %v755 = vsel %vm707, -inf, %v329
      %v756 = vsel %vm708, -inf, %v332
      %v757 = vsel %vm709, -inf, %v334
      %v758 = vsel %vm710, -inf, %v337
      %v759 = vsel %vm711, -inf, %v339
      %v760 = vsel %vm712, -inf, %v342
      %v761 = vsel %vm713, -inf, %v344
      %v762 = vsel %vm714, -inf, %v347
      %v763 = vsel %vm715, -inf, %v349
      %v764 = vsel %vm716, -inf, %v352
      %v765 = vsel %vm717, -inf, %v354
      %v766 = vsel %vm718, -inf, %v357
      %v767 = vsel %vm719, -inf, %v359
      %v768 = vsel %vm720, -inf, %v362
      %v769 = vsel %vm721, -inf, %v364
      %v770 = vsel %vm368, %v754, -inf
      %771 = vmax.xlane.f32.xlu0 %v770
      %v772 = vpop.xlane.xlu0 %771
      %v773 = vsel %vm368, %v755, -inf
      %774 = vmax.xlane.f32.xlu0 %v773
      %v775 = vpop.xlane.xlu0 %774
      %v776 = vsel %vm368, %v756, -inf
      %777 = vmax.xlane.f32.xlu0 %v776
      %v778 = vpop.xlane.xlu0 %777
      %v779 = vsel %vm368, %v757, -inf
      %780 = vmax.xlane.f32.xlu0 %v779
      %v781 = vpop.xlane.xlu0 %780
      %v782 = vsel %vm368, %v758, -inf
      %783 = vmax.xlane.f32.xlu0 %v782
      %v784 = vpop.xlane.xlu0 %783
      %v785 = vsel %vm368, %v759, -inf
      %786 = vmax.xlane.f32.xlu0 %v785
      %v787 = vpop.xlane.xlu0 %786
      %v788 = vsel %vm368, %v760, -inf
      %789 = vmax.xlane.f32.xlu0 %v788
      %v790 = vpop.xlane.xlu0 %789
      %v791 = vsel %vm368, %v761, -inf
      %792 = vmax.xlane.f32.xlu0 %v791
      %v793 = vpop.xlane.xlu0 %792
      %v794 = vsel %vm368, %v762, -inf
      %795 = vmax.xlane.f32.xlu0 %v794
      %v796 = vpop.xlane.xlu0 %795
      %v797 = vsel %vm368, %v763, -inf
      %798 = vmax.xlane.f32.xlu0 %v797
      %v799 = vpop.xlane.xlu0 %798
      %v800 = vsel %vm368, %v764, -inf
      %801 = vmax.xlane.f32.xlu0 %v800
      %v802 = vpop.xlane.xlu0 %801
      %v803 = vsel %vm368, %v765, -inf
      %804 = vmax.xlane.f32.xlu0 %v803
      %v805 = vpop.xlane.xlu0 %804
      %v806 = vsel %vm368, %v766, -inf
      %807 = vmax.xlane.f32.xlu0 %v806
      %v808 = vpop.xlane.xlu0 %807
      %v809 = vsel %vm368, %v767, -inf
      %810 = vmax.xlane.f32.xlu0 %v809
      %v811 = vpop.xlane.xlu0 %810
      %v812 = vsel %vm368, %v768, -inf
      %813 = vmax.xlane.f32.xlu0 %v812
      %v814 = vpop.xlane.xlu0 %813
      %v815 = vsel %vm368, %v769, -inf
      %816 = vmax.xlane.f32.xlu0 %v815
      %v817 = vpop.xlane.xlu0 %816
      %vm818 = vcmp.eq.f32.partialorder %v754, %v772
      %vm819 = vcmp.eq.f32.partialorder %v755, %v775
      %vm820 = vcmp.eq.f32.partialorder %v756, %v778
      %vm821 = vcmp.eq.f32.partialorder %v757, %v781
      %vm822 = vcmp.eq.f32.partialorder %v758, %v784
      %vm823 = vcmp.eq.f32.partialorder %v759, %v787
      %vm824 = vcmp.eq.f32.partialorder %v760, %v790
      %vm825 = vcmp.eq.f32.partialorder %v761, %v793
      %vm826 = vcmp.eq.f32.partialorder %v762, %v796
      %vm827 = vcmp.eq.f32.partialorder %v763, %v799
      %vm828 = vcmp.eq.f32.partialorder %v764, %v802
      %vm829 = vcmp.eq.f32.partialorder %v765, %v805
      %vm830 = vcmp.eq.f32.partialorder %v766, %v808
      %vm831 = vcmp.eq.f32.partialorder %v767, %v811
      %vm832 = vcmp.eq.f32.partialorder %v768, %v814
      %vm833 = vcmp.eq.f32.partialorder %v769, %v817
      %v834 = vsel %vm818, %v367, 8
      %v835 = vsel %vm819, %v367, 8
      %v836 = vsel %vm820, %v367, 8
      %v837 = vsel %vm821, %v367, 8
      %v838 = vsel %vm822, %v367, 8
      %v839 = vsel %vm823, %v367, 8
      %v840 = vsel %vm824, %v367, 8
      %v841 = vsel %vm825, %v367, 8
      %v842 = vsel %vm826, %v367, 8
      %v843 = vsel %vm827, %v367, 8
      %v844 = vsel %vm828, %v367, 8
      %v845 = vsel %vm829, %v367, 8
      %v846 = vsel %vm830, %v367, 8
      %v847 = vsel %vm831, %v367, 8
      %v848 = vsel %vm832, %v367, 8
      %v849 = vsel %vm833, %v367, 8
      %v850 = vsel %vm368, %v834, 2147483647
      %v851 = vand.u32 %v850, 65535
      %v852 = vshra.s32 %v850, 16
      %v853 = vcvt.s32.f32 %v851
      %v854 = vcvt.s32.f32 %v852
      %855 = vmin.xlane.f32.xlu0 %v854
      %v856 = vpop.xlane.xlu0 %855
      %vm857 = vcmp.eq.f32.partialorder %v854, %v856
      %v858 = vsel %vm857, %v853, inf
      %859 = vmin.xlane.f32.xlu0 %v858
      %v860 = vpop.xlane.xlu0 %859
      %v861 = vcvt.f32.s32 %v860
      %v862 = vcvt.f32.s32 %v856
      %v863 = vshll.u32 %v862, 16
      %v864 = vadd.s32 %v863, %v861
      %v865 = vsel %vm368, %v835, 2147483647
      %v866 = vand.u32 %v865, 65535
      %v867 = vshra.s32 %v865, 16
      %v868 = vcvt.s32.f32 %v866
      %v869 = vcvt.s32.f32 %v867
      %870 = vmin.xlane.f32.xlu0 %v869
      %v871 = vpop.xlane.xlu0 %870
      %vm872 = vcmp.eq.f32.partialorder %v869, %v871
      %v873 = vsel %vm872, %v868, inf
      %874 = vmin.xlane.f32.xlu0 %v873
      %v875 = vpop.xlane.xlu0 %874
      %v876 = vcvt.f32.s32 %v875
      %v877 = vcvt.f32.s32 %v871
      %v878 = vshll.u32 %v877, 16
      %v879 = vadd.s32 %v878, %v876
      %v880 = vsel %vm368, %v836, 2147483647
      %v881 = vand.u32 %v880, 65535
      %v882 = vshra.s32 %v880, 16
      %v883 = vcvt.s32.f32 %v881
      %v884 = vcvt.s32.f32 %v882
      %885 = vmin.xlane.f32.xlu0 %v884
      %v886 = vpop.xlane.xlu0 %885
      %vm887 = vcmp.eq.f32.partialorder %v884, %v886
      %v888 = vsel %vm887, %v883, inf
      %889 = vmin.xlane.f32.xlu0 %v888
      %v890 = vpop.xlane.xlu0 %889
      %v891 = vcvt.f32.s32 %v890
      %v892 = vcvt.f32.s32 %v886
      %v893 = vshll.u32 %v892, 16
      %v894 = vadd.s32 %v893, %v891
      %v895 = vsel %vm368, %v837, 2147483647
      %v896 = vand.u32 %v895, 65535
      %v897 = vshra.s32 %v895, 16
      %v898 = vcvt.s32.f32 %v896
      %v899 = vcvt.s32.f32 %v897
      %900 = vmin.xlane.f32.xlu0 %v899
      %v901 = vpop.xlane.xlu0 %900
      %vm902 = vcmp.eq.f32.partialorder %v899, %v901
      %v903 = vsel %vm902, %v898, inf
      %904 = vmin.xlane.f32.xlu0 %v903
      %v905 = vpop.xlane.xlu0 %904
      %v906 = vcvt.f32.s32 %v905
      %v907 = vcvt.f32.s32 %v901
      %v908 = vshll.u32 %v907, 16
      %v909 = vadd.s32 %v908, %v906
      %v910 = vsel %vm368, %v838, 2147483647
      %v911 = vand.u32 %v910, 65535
      %v912 = vshra.s32 %v910, 16
      %v913 = vcvt.s32.f32 %v911
      %v914 = vcvt.s32.f32 %v912
      %915 = vmin.xlane.f32.xlu0 %v914
      %v916 = vpop.xlane.xlu0 %915
      %vm917 = vcmp.eq.f32.partialorder %v914, %v916
      %v918 = vsel %vm917, %v913, inf
      %919 = vmin.xlane.f32.xlu0 %v918
      %v920 = vpop.xlane.xlu0 %919
      %v921 = vcvt.f32.s32 %v920
      %v922 = vcvt.f32.s32 %v916
      %v923 = vshll.u32 %v922, 16
      %v924 = vadd.s32 %v923, %v921
      %v925 = vsel %vm368, %v839, 2147483647
      %v926 = vand.u32 %v925, 65535
      %v927 = vshra.s32 %v925, 16
      %v928 = vcvt.s32.f32 %v926
      %v929 = vcvt.s32.f32 %v927
      %930 = vmin.xlane.f32.xlu0 %v929
      %v931 = vpop.xlane.xlu0 %930
      %vm932 = vcmp.eq.f32.partialorder %v929, %v931
      %v933 = vsel %vm932, %v928, inf
      %934 = vmin.xlane.f32.xlu0 %v933
      %v935 = vpop.xlane.xlu0 %934
      %v936 = vcvt.f32.s32 %v935
      %v937 = vcvt.f32.s32 %v931
      %v938 = vshll.u32 %v937, 16
      %v939 = vadd.s32 %v938, %v936
      %v940 = vsel %vm368, %v840, 2147483647
      %v941 = vand.u32 %v940, 65535
      %v942 = vshra.s32 %v940, 16
      %v943 = vcvt.s32.f32 %v941
      %v944 = vcvt.s32.f32 %v942
      %945 = vmin.xlane.f32.xlu0 %v944
      %v946 = vpop.xlane.xlu0 %945
      %vm947 = vcmp.eq.f32.partialorder %v944, %v946
      %v948 = vsel %vm947, %v943, inf
      %949 = vmin.xlane.f32.xlu0 %v948
      %v950 = vpop.xlane.xlu0 %949
      %v951 = vcvt.f32.s32 %v950
      %v952 = vcvt.f32.s32 %v946
      %v953 = vshll.u32 %v952, 16
      %v954 = vadd.s32 %v953, %v951
      %v955 = vsel %vm368, %v841, 2147483647
      %v956 = vand.u32 %v955, 65535
      %v957 = vshra.s32 %v955, 16
      %v958 = vcvt.s32.f32 %v956
      %v959 = vcvt.s32.f32 %v957
      %960 = vmin.xlane.f32.xlu0 %v959
      %v961 = vpop.xlane.xlu0 %960
      %vm962 = vcmp.eq.f32.partialorder %v959, %v961
      %v963 = vsel %vm962, %v958, inf
      %964 = vmin.xlane.f32.xlu0 %v963
      %v965 = vpop.xlane.xlu0 %964
      %v966 = vcvt.f32.s32 %v965
      %v967 = vcvt.f32.s32 %v961
      %v968 = vshll.u32 %v967, 16
      %v969 = vadd.s32 %v968, %v966
      %v970 = vsel %vm368, %v842, 2147483647
      %v971 = vand.u32 %v970, 65535
      %v972 = vshra.s32 %v970, 16
      %v973 = vcvt.s32.f32 %v971
      %v974 = vcvt.s32.f32 %v972
      %975 = vmin.xlane.f32.xlu0 %v974
      %v976 = vpop.xlane.xlu0 %975
      %vm977 = vcmp.eq.f32.partialorder %v974, %v976
      %v978 = vsel %vm977, %v973, inf
      %979 = vmin.xlane.f32.xlu0 %v978
      %v980 = vpop.xlane.xlu0 %979
      %v981 = vcvt.f32.s32 %v980
      %v982 = vcvt.f32.s32 %v976
      %v983 = vshll.u32 %v982, 16
      %v984 = vadd.s32 %v983, %v981
      %v985 = vsel %vm368, %v843, 2147483647
      %v986 = vand.u32 %v985, 65535
      %v987 = vshra.s32 %v985, 16
      %v988 = vcvt.s32.f32 %v986
      %v989 = vcvt.s32.f32 %v987
      %990 = vmin.xlane.f32.xlu0 %v989
      %v991 = vpop.xlane.xlu0 %990
      %vm992 = vcmp.eq.f32.partialorder %v989, %v991
      %v993 = vsel %vm992, %v988, inf
      %994 = vmin.xlane.f32.xlu0 %v993
      %v995 = vpop.xlane.xlu0 %994
      %v996 = vcvt.f32.s32 %v995
      %v997 = vcvt.f32.s32 %v991
      %v998 = vshll.u32 %v997, 16
      %v999 = vadd.s32 %v998, %v996
      %v1000 = vsel %vm368, %v844, 2147483647
      %v1001 = vand.u32 %v1000, 65535
      %v1002 = vshra.s32 %v1000, 16
      %v1003 = vcvt.s32.f32 %v1001
      %v1004 = vcvt.s32.f32 %v1002
      %1005 = vmin.xlane.f32.xlu0 %v1004
      %v1006 = vpop.xlane.xlu0 %1005
      %vm1007 = vcmp.eq.f32.partialorder %v1004, %v1006
      %v1008 = vsel %vm1007, %v1003, inf
      %1009 = vmin.xlane.f32.xlu0 %v1008
      %v1010 = vpop.xlane.xlu0 %1009
      %v1011 = vcvt.f32.s32 %v1010
      %v1012 = vcvt.f32.s32 %v1006
      %v1013 = vshll.u32 %v1012, 16
      %v1014 = vadd.s32 %v1013, %v1011
      %v1015 = vsel %vm368, %v845, 2147483647
      %v1016 = vand.u32 %v1015, 65535
      %v1017 = vshra.s32 %v1015, 16
      %v1018 = vcvt.s32.f32 %v1016
      %v1019 = vcvt.s32.f32 %v1017
      %1020 = vmin.xlane.f32.xlu0 %v1019
      %v1021 = vpop.xlane.xlu0 %1020
      %vm1022 = vcmp.eq.f32.partialorder %v1019, %v1021
      %v1023 = vsel %vm1022, %v1018, inf
      %1024 = vmin.xlane.f32.xlu0 %v1023
      %v1025 = vpop.xlane.xlu0 %1024
      %v1026 = vcvt.f32.s32 %v1025
      %v1027 = vcvt.f32.s32 %v1021
      %v1028 = vshll.u32 %v1027, 16
      %v1029 = vadd.s32 %v1028, %v1026
      %v1030 = vsel %vm368, %v846, 2147483647
      %v1031 = vand.u32 %v1030, 65535
      %v1032 = vshra.s32 %v1030, 16
      %v1033 = vcvt.s32.f32 %v1031
      %v1034 = vcvt.s32.f32 %v1032
      %1035 = vmin.xlane.f32.xlu0 %v1034
      %v1036 = vpop.xlane.xlu0 %1035
      %vm1037 = vcmp.eq.f32.partialorder %v1034, %v1036
      %v1038 = vsel %vm1037, %v1033, inf
      %1039 = vmin.xlane.f32.xlu0 %v1038
      %v1040 = vpop.xlane.xlu0 %1039
      %v1041 = vcvt.f32.s32 %v1040
      %v1042 = vcvt.f32.s32 %v1036
      %v1043 = vshll.u32 %v1042, 16
      %v1044 = vadd.s32 %v1043, %v1041
      %v1045 = vsel %vm368, %v847, 2147483647
      %v1046 = vand.u32 %v1045, 65535
      %v1047 = vshra.s32 %v1045, 16
      %v1048 = vcvt.s32.f32 %v1046
      %v1049 = vcvt.s32.f32 %v1047
      %1050 = vmin.xlane.f32.xlu0 %v1049
      %v1051 = vpop.xlane.xlu0 %1050
      %vm1052 = vcmp.eq.f32.partialorder %v1049, %v1051
      %v1053 = vsel %vm1052, %v1048, inf
      %1054 = vmin.xlane.f32.xlu0 %v1053
      %v1055 = vpop.xlane.xlu0 %1054
      %v1056 = vcvt.f32.s32 %v1055
      %v1057 = vcvt.f32.s32 %v1051
      %v1058 = vshll.u32 %v1057, 16
      %v1059 = vadd.s32 %v1058, %v1056
      %v1060 = vsel %vm368, %v848, 2147483647
      %v1061 = vand.u32 %v1060, 65535
      %v1062 = vshra.s32 %v1060, 16
      %v1063 = vcvt.s32.f32 %v1061
      %v1064 = vcvt.s32.f32 %v1062
      %1065 = vmin.xlane.f32.xlu0 %v1064
      %v1066 = vpop.xlane.xlu0 %1065
      %vm1067 = vcmp.eq.f32.partialorder %v1064, %v1066
      %v1068 = vsel %vm1067, %v1063, inf
      %1069 = vmin.xlane.f32.xlu0 %v1068
      %v1070 = vpop.xlane.xlu0 %1069
      %v1071 = vcvt.f32.s32 %v1070
      %v1072 = vcvt.f32.s32 %v1066
      %v1073 = vshll.u32 %v1072, 16
      %v1074 = vadd.s32 %v1073, %v1071
      %v1075 = vsel %vm368, %v849, 2147483647
      %v1076 = vand.u32 %v1075, 65535
      %v1077 = vshra.s32 %v1075, 16
      %v1078 = vcvt.s32.f32 %v1076
      %v1079 = vcvt.s32.f32 %v1077
      %1080 = vmin.xlane.f32.xlu0 %v1079
      %v1081 = vpop.xlane.xlu0 %1080
      %vm1082 = vcmp.eq.f32.partialorder %v1079, %v1081
      %v1083 = vsel %vm1082, %v1078, inf
      %1084 = vmin.xlane.f32.xlu0 %v1083
      %v1085 = vpop.xlane.xlu0 %1084
      %v1086 = vcvt.f32.s32 %v1085
      %v1087 = vcvt.f32.s32 %v1081
      %v1088 = vshll.u32 %v1087, 16
      %v1089 = vadd.s32 %v1088, %v1086
      %vm1090 = vcmp.eq.s32.totalorder %v367, 1
      %v1091 = vsel %vm1090, %v864, %v690
      %v1092 = vsel %vm1090, %v879, %v691
      %v1093 = vsel %vm1090, %v894, %v692
      %v1094 = vsel %vm1090, %v909, %v693
      %v1095 = vsel %vm1090, %v924, %v694
      %v1096 = vsel %vm1090, %v939, %v695
      %v1097 = vsel %vm1090, %v954, %v696
      %v1098 = vsel %vm1090, %v969, %v697
      %v1099 = vsel %vm1090, %v984, %v698
      %v1100 = vsel %vm1090, %v999, %v699
      %v1101 = vsel %vm1090, %v1014, %v700
      %v1102 = vsel %vm1090, %v1029, %v701
      %v1103 = vsel %vm1090, %v1044, %v702
      %v1104 = vsel %vm1090, %v1059, %v703
      %v1105 = vsel %vm1090, %v1074, %v704
      %v1106 = vsel %vm1090, %v1089, %v705
      %vm1107 = vcmp.eq.s32.totalorder %v367, %v864
      %vm1108 = vcmp.eq.s32.totalorder %v367, %v879
      %vm1109 = vcmp.eq.s32.totalorder %v367, %v894
      %vm1110 = vcmp.eq.s32.totalorder %v367, %v909
      %vm1111 = vcmp.eq.s32.totalorder %v367, %v924
      %vm1112 = vcmp.eq.s32.totalorder %v367, %v939
      %vm1113 = vcmp.eq.s32.totalorder %v367, %v954
      %vm1114 = vcmp.eq.s32.totalorder %v367, %v969
      %vm1115 = vcmp.eq.s32.totalorder %v367, %v984
      %vm1116 = vcmp.eq.s32.totalorder %v367, %v999
      %vm1117 = vcmp.eq.s32.totalorder %v367, %v1014
      %vm1118 = vcmp.eq.s32.totalorder %v367, %v1029
      %vm1119 = vcmp.eq.s32.totalorder %v367, %v1044
      %vm1120 = vcmp.eq.s32.totalorder %v367, %v1059
      %vm1121 = vcmp.eq.s32.totalorder %v367, %v1074
      %vm1122 = vcmp.eq.s32.totalorder %v367, %v1089
      %v1123 = vsub.f32 %v772, %v371
      %v1124 = vsub.f32 %v775, %v374
      %v1125 = vsub.f32 %v778, %v377
      %v1126 = vsub.f32 %v781, %v380
      %v1127 = vsub.f32 %v784, %v383
      %v1128 = vsub.f32 %v787, %v386
      %v1129 = vsub.f32 %v790, %v389
      %v1130 = vsub.f32 %v793, %v392
      %v1131 = vsub.f32 %v796, %v395
      %v1132 = vsub.f32 %v799, %v398
      %v1133 = vsub.f32 %v802, %v401
      %v1134 = vsub.f32 %v805, %v404
      %v1135 = vsub.f32 %v808, %v407
      %v1136 = vsub.f32 %v811, %v410
      %v1137 = vsub.f32 %v814, %v413
      %v1138 = vsub.f32 %v817, %v416
      %v1139 = vmul.f32 %v1123, 1.442695
      %v1140 = vpow.pop %v1139
      %v1141 = vmul.f32 %v1124, 1.442695
      %v1142 = vpow.pop %v1141
      %v1143 = vmul.f32 %v1125, 1.442695
      %v1144 = vpow.pop %v1143
      %v1145 = vmul.f32 %v1126, 1.442695
      %v1146 = vpow.pop %v1145
      %v1147 = vmul.f32 %v1127, 1.442695
      %v1148 = vpow.pop %v1147
      %v1149 = vmul.f32 %v1128, 1.442695
      %v1150 = vpow.pop %v1149
      %v1151 = vmul.f32 %v1129, 1.442695
      %v1152 = vpow.pop %v1151
      %v1153 = vmul.f32 %v1130, 1.442695
      %v1154 = vpow.pop %v1153
      %v1155 = vmul.f32 %v1131, 1.442695
      %v1156 = vpow.pop %v1155
      %v1157 = vmul.f32 %v1132, 1.442695
      %v1158 = vpow.pop %v1157
      %v1159 = vmul.f32 %v1133, 1.442695
      %v1160 = vpow.pop %v1159
      %v1161 = vmul.f32 %v1134, 1.442695
      %v1162 = vpow.pop %v1161
      %v1163 = vmul.f32 %v1135, 1.442695
      %v1164 = vpow.pop %v1163
      %v1165 = vmul.f32 %v1136, 1.442695
      %v1166 = vpow.pop %v1165
      %v1167 = vmul.f32 %v1137, 1.442695
      %v1168 = vpow.pop %v1167
      %v1169 = vmul.f32 %v1138, 1.442695
      %v1170 = vpow.pop %v1169
      %v1171 = vadd.f32 %v1140, 1.0
      %v1172 = vadd.f32 %v1142, 1.0
      %v1173 = vadd.f32 %v1144, 1.0
      %v1174 = vadd.f32 %v1146, 1.0
      %v1175 = vadd.f32 %v1148, 1.0
      %v1176 = vadd.f32 %v1150, 1.0
      %v1177 = vadd.f32 %v1152, 1.0
      %v1178 = vadd.f32 %v1154, 1.0
      %v1179 = vadd.f32 %v1156, 1.0
      %v1180 = vadd.f32 %v1158, 1.0
      %v1181 = vadd.f32 %v1160, 1.0
      %v1182 = vadd.f32 %v1162, 1.0
      %v1183 = vadd.f32 %v1164, 1.0
      %v1184 = vadd.f32 %v1166, 1.0
      %v1185 = vadd.f32 %v1168, 1.0
      %v1186 = vadd.f32 %v1170, 1.0
      %v1187 = vsel %vm1107, %v1140, 0.0
      %v1188 = vsel %vm1108, %v1142, 0.0
      %v1189 = vsel %vm1109, %v1144, 0.0
      %v1190 = vsel %vm1110, %v1146, 0.0
      %v1191 = vsel %vm1111, %v1148, 0.0
      %v1192 = vsel %vm1112, %v1150, 0.0
      %v1193 = vsel %vm1113, %v1152, 0.0
      %v1194 = vsel %vm1114, %v1154, 0.0
      %v1195 = vsel %vm1115, %v1156, 0.0
      %v1196 = vsel %vm1116, %v1158, 0.0
      %v1197 = vsel %vm1117, %v1160, 0.0
      %v1198 = vsel %vm1118, %v1162, 0.0
      %v1199 = vsel %vm1119, %v1164, 0.0
      %v1200 = vsel %vm1120, %v1166, 0.0
      %v1201 = vsel %vm1121, %v1168, 0.0
      %v1202 = vsel %vm1122, %v1170, 0.0
      %v1203 = vadd.f32 %v738, %v1187
      %v1204 = vadd.f32 %v739, %v1188
      %v1205 = vadd.f32 %v740, %v1189
      %v1206 = vadd.f32 %v741, %v1190
      %v1207 = vadd.f32 %v742, %v1191
      %v1208 = vadd.f32 %v743, %v1192
      %v1209 = vadd.f32 %v744, %v1193
      %v1210 = vadd.f32 %v745, %v1194
      %v1211 = vadd.f32 %v746, %v1195
      %v1212 = vadd.f32 %v747, %v1196
      %v1213 = vadd.f32 %v748, %v1197
      %v1214 = vadd.f32 %v749, %v1198
      %v1215 = vadd.f32 %v750, %v1199
      %v1216 = vadd.f32 %v751, %v1200
      %v1217 = vadd.f32 %v752, %v1201
      %v1218 = vadd.f32 %v753, %v1202
      %v1219 = vrcp.pop %v1171
      %v1220 = vmul.f32 %v1171, %v1219
      %v1221 = vsub.f32 1.0, %v1220
      %v1222 = vmul.f32 %v1219, %v1221
      %v1223 = vadd.f32 %v1219, %v1222
      %vm1224 = vweird.f32 %v1171
      %vm1225 = vweird.f32 %v1219
      %vm1226 = vmor %vm1224, %vm1225
      %v1227 = vsel %vm1226, %v1219, %v1223
      %v1228 = vand.u32 2147483647, %v1171
      %vm1229 = vcmp.eq.f32.partialorder %v1228, 8.507059e+37
      %v1230 = vand.u32 %v1171, 2147483648
      %v1231 = vor.u32 1.1754944e-38, %v1230
      %v1232 = vsel %vm1229, %v1231, %v1227
      %v1233 = vrcp.pop %v1172
      %v1234 = vmul.f32 %v1172, %v1233
      %v1235 = vsub.f32 1.0, %v1234
      %v1236 = vmul.f32 %v1233, %v1235
      %v1237 = vadd.f32 %v1233, %v1236
      %vm1238 = vweird.f32 %v1172
      %vm1239 = vweird.f32 %v1233
      %vm1240 = vmor %vm1238, %vm1239
      %v1241 = vsel %vm1240, %v1233, %v1237
      %v1242 = vand.u32 2147483647, %v1172
      %vm1243 = vcmp.eq.f32.partialorder %v1242, 8.507059e+37
      %v1244 = vand.u32 %v1172, 2147483648
      %v1245 = vor.u32 1.1754944e-38, %v1244
      %v1246 = vsel %vm1243, %v1245, %v1241
      %v1247 = vrcp.pop %v1173
      %v1248 = vmul.f32 %v1173, %v1247
      %v1249 = vsub.f32 1.0, %v1248
      %v1250 = vmul.f32 %v1247, %v1249
      %v1251 = vadd.f32 %v1247, %v1250
      %vm1252 = vweird.f32 %v1173
      %vm1253 = vweird.f32 %v1247
      %vm1254 = vmor %vm1252, %vm1253
      %v1255 = vsel %vm1254, %v1247, %v1251
      %v1256 = vand.u32 2147483647, %v1173
      %vm1257 = vcmp.eq.f32.partialorder %v1256, 8.507059e+37
      %v1258 = vand.u32 %v1173, 2147483648
      %v1259 = vor.u32 1.1754944e-38, %v1258
      %v1260 = vsel %vm1257, %v1259, %v1255
      %v1261 = vrcp.pop %v1174
      %v1262 = vmul.f32 %v1174, %v1261
      %v1263 = vsub.f32 1.0, %v1262
      %v1264 = vmul.f32 %v1261, %v1263
      %v1265 = vadd.f32 %v1261, %v1264
      %vm1266 = vweird.f32 %v1174
      %vm1267 = vweird.f32 %v1261
      %vm1268 = vmor %vm1266, %vm1267
      %v1269 = vsel %vm1268, %v1261, %v1265
      %v1270 = vand.u32 2147483647, %v1174
      %vm1271 = vcmp.eq.f32.partialorder %v1270, 8.507059e+37
      %v1272 = vand.u32 %v1174, 2147483648
      %v1273 = vor.u32 1.1754944e-38, %v1272
      %v1274 = vsel %vm1271, %v1273, %v1269
      %v1275 = vrcp.pop %v1175
      %v1276 = vmul.f32 %v1175, %v1275
      %v1277 = vsub.f32 1.0, %v1276
      %v1278 = vmul.f32 %v1275, %v1277
      %v1279 = vadd.f32 %v1275, %v1278
      %vm1280 = vweird.f32 %v1175
      %vm1281 = vweird.f32 %v1275
      %vm1282 = vmor %vm1280, %vm1281
      %v1283 = vsel %vm1282, %v1275, %v1279
      %v1284 = vand.u32 2147483647, %v1175
      %vm1285 = vcmp.eq.f32.partialorder %v1284, 8.507059e+37
      %v1286 = vand.u32 %v1175, 2147483648
      %v1287 = vor.u32 1.1754944e-38, %v1286
      %v1288 = vsel %vm1285, %v1287, %v1283
      %v1289 = vrcp.pop %v1176
      %v1290 = vmul.f32 %v1176, %v1289
      %v1291 = vsub.f32 1.0, %v1290
      %v1292 = vmul.f32 %v1289, %v1291
      %v1293 = vadd.f32 %v1289, %v1292
      %vm1294 = vweird.f32 %v1176
      %vm1295 = vweird.f32 %v1289
      %vm1296 = vmor %vm1294, %vm1295
      %v1297 = vsel %vm1296, %v1289, %v1293
      %v1298 = vand.u32 2147483647, %v1176
      %vm1299 = vcmp.eq.f32.partialorder %v1298, 8.507059e+37
      %v1300 = vand.u32 %v1176, 2147483648
      %v1301 = vor.u32 1.1754944e-38, %v1300
      %v1302 = vsel %vm1299, %v1301, %v1297
      %v1303 = vrcp.pop %v1177
      %v1304 = vmul.f32 %v1177, %v1303
      %v1305 = vsub.f32 1.0, %v1304
      %v1306 = vmul.f32 %v1303, %v1305
      %v1307 = vadd.f32 %v1303, %v1306
      %vm1308 = vweird.f32 %v1177
      %vm1309 = vweird.f32 %v1303
      %vm1310 = vmor %vm1308, %vm1309
      %v1311 = vsel %vm1310, %v1303, %v1307
      %v1312 = vand.u32 2147483647, %v1177
      %vm1313 = vcmp.eq.f32.partialorder %v1312, 8.507059e+37
      %v1314 = vand.u32 %v1177, 2147483648
      %v1315 = vor.u32 1.1754944e-38, %v1314
      %v1316 = vsel %vm1313, %v1315, %v1311
      %v1317 = vrcp.pop %v1178
      %v1318 = vmul.f32 %v1178, %v1317
      %v1319 = vsub.f32 1.0, %v1318
      %v1320 = vmul.f32 %v1317, %v1319
      %v1321 = vadd.f32 %v1317, %v1320
      %vm1322 = vweird.f32 %v1178
      %vm1323 = vweird.f32 %v1317
      %vm1324 = vmor %vm1322, %vm1323
      %v1325 = vsel %vm1324, %v1317, %v1321
      %v1326 = vand.u32 2147483647, %v1178
      %vm1327 = vcmp.eq.f32.partialorder %v1326, 8.507059e+37
      %v1328 = vand.u32 %v1178, 2147483648
      %v1329 = vor.u32 1.1754944e-38, %v1328
      %v1330 = vsel %vm1327, %v1329, %v1325
      %v1331 = vrcp.pop %v1179
      %v1332 = vmul.f32 %v1179, %v1331
      %v1333 = vsub.f32 1.0, %v1332
      %v1334 = vmul.f32 %v1331, %v1333
      %v1335 = vadd.f32 %v1331, %v1334
      %vm1336 = vweird.f32 %v1179
      %vm1337 = vweird.f32 %v1331
      %vm1338 = vmor %vm1336, %vm1337
      %v1339 = vsel %vm1338, %v1331, %v1335
      %v1340 = vand.u32 2147483647, %v1179
      %vm1341 = vcmp.eq.f32.partialorder %v1340, 8.507059e+37
      %v1342 = vand.u32 %v1179, 2147483648
      %v1343 = vor.u32 1.1754944e-38, %v1342
      %v1344 = vsel %vm1341, %v1343, %v1339
      %v1345 = vrcp.pop %v1180
      %v1346 = vmul.f32 %v1180, %v1345
      %v1347 = vsub.f32 1.0, %v1346
      %v1348 = vmul.f32 %v1345, %v1347
      %v1349 = vadd.f32 %v1345, %v1348
      %vm1350 = vweird.f32 %v1180
      %vm1351 = vweird.f32 %v1345
      %vm1352 = vmor %vm1350, %vm1351
      %v1353 = vsel %vm1352, %v1345, %v1349
      %v1354 = vand.u32 2147483647, %v1180
      %vm1355 = vcmp.eq.f32.partialorder %v1354, 8.507059e+37
      %v1356 = vand.u32 %v1180, 2147483648
      %v1357 = vor.u32 1.1754944e-38, %v1356
      %v1358 = vsel %vm1355, %v1357, %v1353
      %v1359 = vrcp.pop %v1181
      %v1360 = vmul.f32 %v1181, %v1359
      %v1361 = vsub.f32 1.0, %v1360
      %v1362 = vmul.f32 %v1359, %v1361
      %v1363 = vadd.f32 %v1359, %v1362
      %vm1364 = vweird.f32 %v1181
      %vm1365 = vweird.f32 %v1359
      %vm1366 = vmor %vm1364, %vm1365
      %v1367 = vsel %vm1366, %v1359, %v1363
      %v1368 = vand.u32 2147483647, %v1181
      %vm1369 = vcmp.eq.f32.partialorder %v1368, 8.507059e+37
      %v1370 = vand.u32 %v1181, 2147483648
      %v1371 = vor.u32 1.1754944e-38, %v1370
      %v1372 = vsel %vm1369, %v1371, %v1367
      %v1373 = vrcp.pop %v1182
      %v1374 = vmul.f32 %v1182, %v1373
      %v1375 = vsub.f32 1.0, %v1374
      %v1376 = vmul.f32 %v1373, %v1375
      %v1377 = vadd.f32 %v1373, %v1376
      %vm1378 = vweird.f32 %v1182
      %vm1379 = vweird.f32 %v1373
      %vm1380 = vmor %vm1378, %vm1379
      %v1381 = vsel %vm1380, %v1373, %v1377
      %v1382 = vand.u32 2147483647, %v1182
      %vm1383 = vcmp.eq.f32.partialorder %v1382, 8.507059e+37
      %v1384 = vand.u32 %v1182, 2147483648
      %v1385 = vor.u32 1.1754944e-38, %v1384
      %v1386 = vsel %vm1383, %v1385, %v1381
      %v1387 = vrcp.pop %v1183
      %v1388 = vmul.f32 %v1183, %v1387
      %v1389 = vsub.f32 1.0, %v1388
      %v1390 = vmul.f32 %v1387, %v1389
      %v1391 = vadd.f32 %v1387, %v1390
      %vm1392 = vweird.f32 %v1183
      %vm1393 = vweird.f32 %v1387
      %vm1394 = vmor %vm1392, %vm1393
      %v1395 = vsel %vm1394, %v1387, %v1391
      %v1396 = vand.u32 2147483647, %v1183
      %vm1397 = vcmp.eq.f32.partialorder %v1396, 8.507059e+37
      %v1398 = vand.u32 %v1183, 2147483648
      %v1399 = vor.u32 1.1754944e-38, %v1398
      %v1400 = vsel %vm1397, %v1399, %v1395
      %v1401 = vrcp.pop %v1184
      %v1402 = vmul.f32 %v1184, %v1401
      %v1403 = vsub.f32 1.0, %v1402
      %v1404 = vmul.f32 %v1401, %v1403
      %v1405 = vadd.f32 %v1401, %v1404
      %vm1406 = vweird.f32 %v1184
      %vm1407 = vweird.f32 %v1401
      %vm1408 = vmor %vm1406, %vm1407
      %v1409 = vsel %vm1408, %v1401, %v1405
      %v1410 = vand.u32 2147483647, %v1184
      %vm1411 = vcmp.eq.f32.partialorder %v1410, 8.507059e+37
      %v1412 = vand.u32 %v1184, 2147483648
      %v1413 = vor.u32 1.1754944e-38, %v1412
      %v1414 = vsel %vm1411, %v1413, %v1409
      %v1415 = vrcp.pop %v1185
      %v1416 = vmul.f32 %v1185, %v1415
      %v1417 = vsub.f32 1.0, %v1416
      %v1418 = vmul.f32 %v1415, %v1417
      %v1419 = vadd.f32 %v1415, %v1418
      %vm1420 = vweird.f32 %v1185
      %vm1421 = vweird.f32 %v1415
      %vm1422 = vmor %vm1420, %vm1421
      %v1423 = vsel %vm1422, %v1415, %v1419
      %v1424 = vand.u32 2147483647, %v1185
      %vm1425 = vcmp.eq.f32.partialorder %v1424, 8.507059e+37
      %v1426 = vand.u32 %v1185, 2147483648
      %v1427 = vor.u32 1.1754944e-38, %v1426
      %v1428 = vsel %vm1425, %v1427, %v1423
      %v1429 = vrcp.pop %v1186
      %v1430 = vmul.f32 %v1186, %v1429
      %v1431 = vsub.f32 1.0, %v1430
      %v1432 = vmul.f32 %v1429, %v1431
      %v1433 = vadd.f32 %v1429, %v1432
      %vm1434 = vweird.f32 %v1186
      %vm1435 = vweird.f32 %v1429
      %vm1436 = vmor %vm1434, %vm1435
      %v1437 = vsel %vm1436, %v1429, %v1433
      %v1438 = vand.u32 2147483647, %v1186
      %vm1439 = vcmp.eq.f32.partialorder %v1438, 8.507059e+37
      %v1440 = vand.u32 %v1186, 2147483648
      %v1441 = vor.u32 1.1754944e-38, %v1440
      %v1442 = vsel %vm1439, %v1441, %v1437
      %v1443 = vmul.f32 %v1203, %v1232
      %v1444 = vmul.f32 %v1204, %v1246
      %v1445 = vmul.f32 %v1205, %v1260
      %v1446 = vmul.f32 %v1206, %v1274
      %v1447 = vmul.f32 %v1207, %v1288
      %v1448 = vmul.f32 %v1208, %v1302
      %v1449 = vmul.f32 %v1209, %v1316
      %v1450 = vmul.f32 %v1210, %v1330
      %v1451 = vmul.f32 %v1211, %v1344
      %v1452 = vmul.f32 %v1212, %v1358
      %v1453 = vmul.f32 %v1213, %v1372
      %v1454 = vmul.f32 %v1214, %v1386
      %v1455 = vmul.f32 %v1215, %v1400
      %v1456 = vmul.f32 %v1216, %v1414
      %v1457 = vmul.f32 %v1217, %v1428
      %v1458 = vmul.f32 %v1218, %v1442
      %1459 = vst.msk [vmem:[%s207] sm:$0xff] %vm368, %v1443
      %1460 = vst.msk [vmem:[%s207 + $0x8] sm:$0xff] %vm368, %v1444
      %1461 = vst.msk [vmem:[%s207 + $0x10] sm:$0xff] %vm368, %v1445
      %1462 = vst.msk [vmem:[%s207 + $0x18] sm:$0xff] %vm368, %v1446
      %1463 = vst.msk [vmem:[%s207 + $0x20] sm:$0xff] %vm368, %v1447
      %1464 = vst.msk [vmem:[%s207 + $0x28] sm:$0xff] %vm368, %v1448
      %1465 = vst.msk [vmem:[%s207 + $0x30] sm:$0xff] %vm368, %v1449
      %1466 = vst.msk [vmem:[%s207 + $0x38] sm:$0xff] %vm368, %v1450
      %1467 = vst.msk [vmem:[%s207 + $0x40] sm:$0xff] %vm368, %v1451
      %1468 = vst.msk [vmem:[%s207 + $0x48] sm:$0xff] %vm368, %v1452
      %1469 = vst.msk [vmem:[%s207 + $0x50] sm:$0xff] %vm368, %v1453
      %1470 = vst.msk [vmem:[%s207 + $0x58] sm:$0xff] %vm368, %v1454
      %1471 = vst.msk [vmem:[%s207 + $0x60] sm:$0xff] %vm368, %v1455
      %1472 = vst.msk [vmem:[%s207 + $0x68] sm:$0xff] %vm368, %v1456
      %1473 = vst.msk [vmem:[%s207 + $0x70] sm:$0xff] %vm368, %v1457
      %1474 = vst.msk [vmem:[%s207 + $0x78] sm:$0xff] %vm368, %v1458
      %vm1475 = vcmask 15360
      %1476 = vst.msk [vmem:[%s213] sm:$0xff] %vm1475, %v1091
      %1477 = vst.msk [vmem:[%s213 + $0x8] sm:$0xff] %vm1475, %v1092
      %1478 = vst.msk [vmem:[%s213 + $0x10] sm:$0xff] %vm1475, %v1093
      %1479 = vst.msk [vmem:[%s213 + $0x18] sm:$0xff] %vm1475, %v1094
      %1480 = vst.msk [vmem:[%s213 + $0x20] sm:$0xff] %vm1475, %v1095
      %1481 = vst.msk [vmem:[%s213 + $0x28] sm:$0xff] %vm1475, %v1096
      %1482 = vst.msk [vmem:[%s213 + $0x30] sm:$0xff] %vm1475, %v1097
      %1483 = vst.msk [vmem:[%s213 + $0x38] sm:$0xff] %vm1475, %v1098
      %1484 = vst.msk [vmem:[%s213 + $0x40] sm:$0xff] %vm1475, %v1099
      %1485 = vst.msk [vmem:[%s213 + $0x48] sm:$0xff] %vm1475, %v1100
      %1486 = vst.msk [vmem:[%s213 + $0x50] sm:$0xff] %vm1475, %v1101
      %1487 = vst.msk [vmem:[%s213 + $0x58] sm:$0xff] %vm1475, %v1102
      %1488 = vst.msk [vmem:[%s213 + $0x60] sm:$0xff] %vm1475, %v1103
      %1489 = vst.msk [vmem:[%s213 + $0x68] sm:$0xff] %vm1475, %v1104
      %1490 = vst.msk [vmem:[%s213 + $0x70] sm:$0xff] %vm1475, %v1105
      %1491 = vst.msk [vmem:[%s213 + $0x78] sm:$0xff] %vm1475, %v1106
      %s1492 = smul.u32 16, %s16
      %p1493 = scmp.lt.s32.totalorder %s1492, 31
      %s1494 = scalar_select %p1493, %s1492, 31
      %s1495 = smul.addr %s1494, 8
      %s1496 = scalar_lea.vmem %s3, %s1495
      %s1497 = smul.u32 16, %s16
      %p1498 = scmp.lt.s32.totalorder %s1497, 31
      %s1499 = scalar_select %p1498, %s1497, 31
      %s1500 = smul.addr %s1499, 8
      %s1501 = scalar_lea.vmem %s4, %s1500
      // Predicated region
      $region33: #{tpu_custom_call.1} parent=31 // pred_check
        %p1502 = pneg %p102
      $region34: #{tpu_custom_call.1} parent=31 // pred_check_branch
        %1504 = sbr.rel (%p1502) target = $region36
      $region35: #{tpu_custom_call.1} parent=31 // pred_region
        %s1505 = smul.u32 16, %s16
      $region36: #{tpu_custom_call.1} parent=31 // pred_fallthru
        _
      // Predicated region
      $region37: #{tpu_custom_call.1} parent=31 // pred_check
        %p1506 = pneg %p128
      $region38: #{tpu_custom_call.1} parent=31 // pred_check_branch
        %1508 = sbr.rel (%p1506) target = $region40
      $region39: #{tpu_custom_call.1} parent=31 // pred_region
        %s1509 = smul.u32 16, %s16
      $region40: #{tpu_custom_call.1} parent=31 // pred_fallthru
        _
    $region32: #{tpu_custom_call.1} parent=5 // pred_fallthru
      _
    %p1510 = scmp.le.s32.totalorder 2, %s11
    // Predicated region
    $region41: #{tpu_custom_call.1} parent=5 // pred_check
      %p1511 = pneg %p1510
    $region42: #{tpu_custom_call.1} parent=5 // pred_check_branch
      %1513 = sbr.rel (%p1511) target = $region44
    $region43: #{tpu_custom_call.1} parent=5 // pred_region
      %s1514 = ssub.s32 %s11, 2
      // Predicated region
      $region45: #{tpu_custom_call.1} parent=43 // pred_check
        %p1515 = pneg %p108
      $region46: #{tpu_custom_call.1} parent=43 // pred_check_branch
        %1517 = sbr.rel (%p1515) target = $region48
      $region47: #{tpu_custom_call.1} parent=43 // pred_region
        %s1518 = smul.u32 16, %s17
        %p1519 = scmp.lt.s32.totalorder %s1518, 31
        %s1520 = scalar_select %p1519, %s1518, 31
        %s1521 = smul.addr %s1520, 8
        %s1522 = scalar_lea.vmem %s3, %s1521
      $region48: #{tpu_custom_call.1} parent=43 // pred_fallthru
        _
      // Predicated region
      $region49: #{tpu_custom_call.1} parent=43 // pred_check
        %p1523 = pneg %p134
      $region50: #{tpu_custom_call.1} parent=43 // pred_check_branch
        %1525 = sbr.rel (%p1523) target = $region52
      $region51: #{tpu_custom_call.1} parent=43 // pred_region
        %s1526 = smul.u32 16, %s17
        %p1527 = scmp.lt.s32.totalorder %s1526, 31
        %s1528 = scalar_select %p1527, %s1526, 31
        %s1529 = smul.addr %s1528, 8
        %s1530 = scalar_lea.vmem %s4, %s1529
      $region52: #{tpu_custom_call.1} parent=43 // pred_fallthru
        _
    $region44: #{tpu_custom_call.1} parent=5 // pred_fallthru
      _
  $region6: #{tpu_custom_call.1} parent=0 // loop_footer
    %s15 = sadd.s32 1, %s11
  $region7: #{tpu_custom_call.1} parent=0 // loop_footer_branch
    %10 = sbr.rel target = $region3
  $region8: #{tpu_custom_call.1} parent=0 // loop_exit
    _

</llo_original>
